<compile_context>
chip_gen: v7x
topology: tpu7x:2x2x1
jax: 0.10.0
libtpu: 0.0.40
codegen_flags: <defaults>
</compile_context>

<pallas_src>
import jax
import jax.numpy as jnp
from jax import lax
from jax.experimental import pallas as pl
from jax.experimental.pallas import tpu as pltpu

_LANES = 128
_MAX_ROW_TILE = 8192  # (rt, in_dim) blocks pad to ~512 B/row in VMEM -> cap rt


def _round_up(x, m):
    return -(-x // m) * m


def _cores_per_device():
    """TensorCores the ('parallel',) grid axis can shard across (best effort)."""
    try:
        info = pltpu.get_tpu_info()
        for attr in ("num_cores", "tensorcore_count", "num_tensorcores", "core_count"):
            v = getattr(info, attr, None)
            if isinstance(v, int) and 0 < v <= 8:
                return v
    except Exception:
        pass
    try:
        dev = jax.devices()[0]
        if getattr(dev, "platform", "") != "tpu":
            return 1
        for attr in ("num_cores", "core_count"):
            v = getattr(dev, attr, None)
            if isinstance(v, int) and 0 < v <= 8:
                return v
        kind = str(getattr(dev, "device_kind", "")).lower()
        if any(tag in kind for tag in ("v7", "7x", "v4", "v5p")):
            return 2
    except Exception:
        pass
    return 1


def _choose_row_tile(M):
    """Lane-aligned row tile scaled with M, with a per-chip step policy."""
    m128 = _round_up(max(int(M), 1), _LANES)
    n_cores = _cores_per_device()
    if n_cores > 1 and m128 >= 2 * n_cores * _LANES:
        # Multi-TC (v7x / megacore): >= 2 pipeline iterations per core so both
        # cores get work and step i+1 DMA hides behind step i compute.
        target_steps = 2 * n_cores
        rt = _round_up(-(-m128 // target_steps), _LANES)
    else:
        # Single-TC (v5e/v6e): the grid is a serial loop -> one big tile.
        rt = m128
    rt = max(_LANES, min(rt, _MAX_ROW_TILE, m128))
    return rt, m128


# ----------------------------------------------------------------------------
# Kernel
# ----------------------------------------------------------------------------
def _make_mlp_kernel(activations):
    """Fused MLP kernel, feature-major compute: h = act(W @ h + b) per layer."""

    def kernel(*refs):
        x_ref = refs[0]          # (row_tile, in_dim)  natural layout
        o_ref = refs[-1]         # (out_dim, row_tile) feature-major / lane-dense
        p_refs = refs[1:-1]      # interleaved (w0, b0, w1, b1, ...)

        h = x_ref[...].astype(jnp.float32)
        for li, act in enumerate(activations):
            w = p_refs[2 * li][...].astype(jnp.float32)       # (out, in)
            b = p_refs[2 * li + 1][...].astype(jnp.float32)   # (out, 1)
            if li == 0:
                # Contract the feature axis of both operands (q @ k.T
                # pattern): (out, in) x (rt, in) -> (out, rt).  This puts
                # activations in feature-major / lane-dense form without any
                # wrapper-side HBM transpose of the input slab.
                h = lax.dot_general(
                    w, h, (((1,), (1,)), ((), ())),
                    preferred_element_type=jnp.float32) + b
            else:
                # (out, in) @ (in, rt) -> (out, rt): MXU matmul, f32 acc;
                # bias is a lane-broadcast add.
                h = jnp.dot(w, h, preferred_element_type=jnp.float32) + b
            if act is not None:
                h = act(h)
        o_ref[...] = h.astype(o_ref.dtype)

    return kernel


# ----------------------------------------------------------------------------
# Wrapper
# ----------------------------------------------------------------------------
def decoder_forward_pallas(xz, params, activations):
    """Run the Decoder MLP as a single fused Pallas kernel.

    xz:      [batch, num_points, input_dim]
    params:  list of (w, b) with w: (out, in) (PyTorch layout), b: (out, 1)
    returns: (y_target_mean [batch, num_points, out_dim], 0.005)
    """
    batch, num_points, in_dim = xz.shape
    out_dim = params[-1][0].shape[0]
    M = batch * num_points

    rt, m128 = _choose_row_tile(M)
    grid_steps = -(-m128 // rt)

    # Natural layout slab; only a <=127-row zero pad for lane alignment.
    x2d = xz.reshape(M, in_dim).astype(jnp.float32)
    if m128 != M:
        x2d = jnp.pad(x2d, ((0, m128 - M), (0, 0)))

    in_specs = [pl.BlockSpec((rt, in_dim), lambda i: (i, 0))]
    flat_params = []
    for (w, b) in params:
        # Constant index_map -> blocks stay resident in VMEM across the grid.
        in_specs.append(pl.BlockSpec(w.shape, lambda i: (0, 0)))
        in_specs.append(pl.BlockSpec(b.shape, lambda i: (0, 0)))
        flat_params.extend([w, b])
    out_spec = pl.BlockSpec((out_dim, rt), lambda i: (0, i))

    flops = 2 * m128 * sum(int(w.shape[0]) * int(w.shape[1]) for (w, _) in params)
    bytes_accessed = 4 * (m128 * (in_dim + out_dim)
                          + sum(int(w.size) + int(b.size) for (w, b) in params))
    cost = pl.CostEstimate(flops=flops, transcendentals=0,
                           bytes_accessed=bytes_accessed)

    yT = pl.pallas_call(
        _make_mlp_kernel(activations),
        out_shape=jax.ShapeDtypeStruct((out_dim, m128), jnp.float32),
        grid_spec=pltpu.PrefetchScalarGridSpec(
            num_scalar_prefetch=0,
            grid=(grid_steps,),
            in_specs=in_specs,
            out_specs=out_spec,
        ),
        compiler_params=pltpu.CompilerParams(
            dimension_semantics=("parallel",),
            vmem_limit_bytes=32 * 1024 * 1024,
        ),
        cost_estimate=cost,
    )(x2d, *flat_params)

    # (out_dim, m128) -> drop padding -> (batch, num_points, out_dim).
    # For out_dim == 1 the transpose is a free reshape.
    y_target_mean = yT[:, :M].T.reshape(batch, num_points, out_dim)
    y_target_constant_std = 0.005
    return y_target_mean, y_target_constant_std


# ----------------------------------------------------------------------------
# Parameter construction (mirrors Decoder.__init__ with init_func=normal_)
# ----------------------------------------------------------------------------
def init_decoder_params(key, input_dim, g_specs):
    """g_specs: list of (out_features, activation_fn_or_None).

    PyTorch: init_func (normal_, std=1) applied to weight; bias keeps the
    default Linear init (uniform(-1/sqrt(in), 1/sqrt(in))).
    Weights stored in PyTorch layout (out_features, in_features).
    """
    params = []
    prev = input_dim
    for (out_features, _act) in g_specs:
        key, kw, kb = jax.random.split(key, 3)
        w = jax.random.normal(kw, (out_features, prev), dtype=jnp.float32)
        bound = float(prev) ** -0.5
        b = jax.random.uniform(kb, (out_features, 1), dtype=jnp.float32,
                               minval=-bound, maxval=bound)
        params.append((w, b))
        prev = out_features
    return params


# Pure-JAX reference for a sanity check (same math as PyTorch x @ W.T + b).
def decoder_forward_ref(xz, params, activations):
    h = xz
    for (w, b), act in zip(params, activations):
        h = jnp.dot(h, w.T) + b[:, 0]
        if act is not None:
            h = act(h)
    return h, 0.005


if __name__ == "__main__":
    key = jax.random.PRNGKey(0)

    # Module-consistent shapes: x_dim=2 features, z_dim=4 -> input_dim=6;
    # g_specs = [(32, ReLU), (32, ReLU), (1, None)].
    x_dim, z_dim = 2, 4
    input_dim = x_dim + z_dim
    relu = lambda t: jnp.maximum(t, 0.0)
    g_specs = [(32, relu), (32, relu), (1, None)]
    activations = [act for (_, act) in g_specs]

    key, kp = jax.random.split(key)
    params = init_decoder_params(kp, input_dim, g_specs)

    # Case 1: M = 2*512 = 1024 rows (lane-aligned; single big tile on
    # single-TC chips, 4 tiles on v7x).
    key, kx1 = jax.random.split(key)
    xz1 = jax.random.normal(kx1, (2, 512, input_dim), dtype=jnp.float32)
    mean1, std1 = decoder_forward_pallas(xz1, params, activations)
    mean1 = jax.block_until_ready(mean1)
    ref1, ref_std = decoder_forward_ref(xz1, params, activations)
    assert mean1.shape == (2, 512, 1)
    assert std1 == ref_std == 0.005
    assert jnp.allclose(mean1, ref1, atol=1e-3, rtol=1e-4)

    # Case 2: ragged M = 2*50 = 100 -> exercises the lane-alignment pad path.
    key, kx2 = jax.random.split(key)
    xz2 = jax.random.normal(kx2, (2, 50, input_dim), dtype=jnp.float32)
    mean2, std2 = decoder_forward_pallas(xz2, params, activations)
    mean2 = jax.block_until_ready(mean2)
    ref2, _ = decoder_forward_ref(xz2, params, activations)
    assert mean2.shape == (2, 50, 1)
    assert std2 == 0.005
    assert jnp.allclose(mean2, ref2, atol=1e-3, rtol=1e-4)

    print("KERNEL_OK")
</pallas_src>

<mosaic_0001>
module attributes {stable_mosaic.version = 11 : i64} {
  func.func @kernel(%arg0: i32, %arg1: memref<1024x6xf32, #tpu.memory_space<vmem>>, %arg2: memref<32x6xf32, #tpu.memory_space<vmem>>, %arg3: memref<32x1xf32, #tpu.memory_space<vmem>>, %arg4: memref<32x32xf32, #tpu.memory_space<vmem>>, %arg5: memref<32x1xf32, #tpu.memory_space<vmem>>, %arg6: memref<1x32xf32, #tpu.memory_space<vmem>>, %arg7: memref<1x1xf32, #tpu.memory_space<vmem>>, %arg8: memref<1x1024xf32, #tpu.memory_space<vmem>>) attributes {dimension_semantics = [#tpu.dimension_semantics<parallel>], iteration_bounds = array<i64: 1>, scalar_prefetch = 0 : i64, scratch_operands = 0 : i64, tpu.core_type = #tpu.core_type<tc>, window_params = [{transform_indices = @transform_0, window_bounds = array<i64: 1024, 6>}, {pipeline_mode = #tpu.pipeline_mode<synchronous>, transform_indices = @transform_1, window_bounds = array<i64: 32, 6>}, {pipeline_mode = #tpu.pipeline_mode<synchronous>, transform_indices = @transform_2, window_bounds = array<i64: 32, 1>}, {pipeline_mode = #tpu.pipeline_mode<synchronous>, transform_indices = @transform_3, window_bounds = array<i64: 32, 32>}, {pipeline_mode = #tpu.pipeline_mode<synchronous>, transform_indices = @transform_4, window_bounds = array<i64: 32, 1>}, {pipeline_mode = #tpu.pipeline_mode<synchronous>, transform_indices = @transform_5, window_bounds = array<i64: 1, 32>}, {pipeline_mode = #tpu.pipeline_mode<synchronous>, transform_indices = @transform_6, window_bounds = array<i64: 1, 1>}, {transform_indices = @transform_7, window_bounds = array<i64: 1, 1024>}]} {
    %c0 = arith.constant 0 : index
    %c0_0 = arith.constant 0 : index
    %0 = vector.load %arg1[%c0, %c0_0] : memref<1024x6xf32, #tpu.memory_space<vmem>>, vector<1024x6xf32>
    %c0_1 = arith.constant 0 : index
    %c0_2 = arith.constant 0 : index
    %1 = vector.load %arg2[%c0_1, %c0_2] : memref<32x6xf32, #tpu.memory_space<vmem>>, vector<32x6xf32>
    %c0_3 = arith.constant 0 : index
    %c0_4 = arith.constant 0 : index
    %2 = vector.load %arg3[%c0_3, %c0_4] : memref<32x1xf32, #tpu.memory_space<vmem>>, vector<32x1xf32>
    %cst = arith.constant dense<0.000000e+00> : vector<32x1024xf32>
    %3 = tpu.matmul %1, %0, %cst {dimension_numbers = #tpu.dot_dimension_numbers<[1], [1], [0], [0], [0, 0, 1, 0], [], []>} : vector<32x6xf32>, vector<1024x6xf32>, vector<32x1024xf32> -> vector<32x1024xf32>
    %4 = vector.broadcast %2 : vector<32x1xf32> to vector<32x1024xf32>
    %5 = arith.addf %3, %4 : vector<32x1024xf32>
    %cst_5 = arith.constant 0.000000e+00 : f32
    %6 = vector.broadcast %cst_5 : f32 to vector<32x1024xf32>
    %7 = arith.maximumf %5, %6 : vector<32x1024xf32>
    %c0_6 = arith.constant 0 : index
    %c0_7 = arith.constant 0 : index
    %8 = vector.load %arg4[%c0_6, %c0_7] : memref<32x32xf32, #tpu.memory_space<vmem>>, vector<32x32xf32>
    %c0_8 = arith.constant 0 : index
    %c0_9 = arith.constant 0 : index
    %9 = vector.load %arg5[%c0_8, %c0_9] : memref<32x1xf32, #tpu.memory_space<vmem>>, vector<32x1xf32>
    %cst_10 = arith.constant dense<0.000000e+00> : vector<32x1024xf32>
    %10 = tpu.matmul %8, %7, %cst_10 {dimension_numbers = #tpu.dot_dimension_numbers<[1], [0], [0], [1], [0, 0, 1, 1], [], []>} : vector<32x32xf32>, vector<32x1024xf32>, vector<32x1024xf32> -> vector<32x1024xf32>
    %11 = vector.broadcast %9 : vector<32x1xf32> to vector<32x1024xf32>
    %12 = arith.addf %10, %11 : vector<32x1024xf32>
    %cst_11 = arith.constant 0.000000e+00 : f32
    %13 = vector.broadcast %cst_11 : f32 to vector<32x1024xf32>
    %14 = arith.maximumf %12, %13 : vector<32x1024xf32>
    %c0_12 = arith.constant 0 : index
    %c0_13 = arith.constant 0 : index
    %15 = vector.load %arg6[%c0_12, %c0_13] : memref<1x32xf32, #tpu.memory_space<vmem>>, vector<1x32xf32>
    %c0_14 = arith.constant 0 : index
    %c0_15 = arith.constant 0 : index
    %16 = vector.load %arg7[%c0_14, %c0_15] : memref<1x1xf32, #tpu.memory_space<vmem>>, vector<1x1xf32>
    %cst_16 = arith.constant dense<0.000000e+00> : vector<1x1024xf32>
    %17 = tpu.matmul %15, %14, %cst_16 {dimension_numbers = #tpu.dot_dimension_numbers<[1], [0], [0], [1], [0, 0, 1, 1], [], []>} : vector<1x32xf32>, vector<32x1024xf32>, vector<1x1024xf32> -> vector<1x1024xf32>
    %18 = vector.broadcast %16 : vector<1x1xf32> to vector<1x1024xf32>
    %19 = arith.addf %17, %18 : vector<1x1024xf32>
    %c0_17 = arith.constant 0 : index
    %c0_18 = arith.constant 0 : index
    %20 = vector.load %arg8[%c0_17, %c0_18] : memref<1x1024xf32, #tpu.memory_space<vmem>>, vector<1x1024xf32>
    tpu.vector_store %arg8[%c0_17, %c0_18], %19 {strides = array<i32>} : memref<1x1024xf32, #tpu.memory_space<vmem>>, vector<1x1024xf32>,
    return
  }
  func.func @transform_0(%arg0: i32) -> (i32, i32) {
    %c0_i32 = arith.constant 0 : i32
    %c0_i32_0 = arith.constant 0 : i32
    return %arg0, %c0_i32 : i32, i32
  }
  func.func @transform_1(%arg0: i32) -> (i32, i32) {
    %c0_i32 = arith.constant 0 : i32
    %c0_i32_0 = arith.constant 0 : i32
    %c0_i32_1 = arith.constant 0 : i32
    return %c0_i32, %c0_i32_0 : i32, i32
  }
  func.func @transform_2(%arg0: i32) -> (i32, i32) {
    %c0_i32 = arith.constant 0 : i32
    %c0_i32_0 = arith.constant 0 : i32
    %c0_i32_1 = arith.constant 0 : i32
    return %c0_i32, %c0_i32_0 : i32, i32
  }
  func.func @transform_3(%arg0: i32) -> (i32, i32) {
    %c0_i32 = arith.constant 0 : i32
    %c0_i32_0 = arith.constant 0 : i32
    %c0_i32_1 = arith.constant 0 : i32
    return %c0_i32, %c0_i32_0 : i32, i32
  }
  func.func @transform_4(%arg0: i32) -> (i32, i32) {
    %c0_i32 = arith.constant 0 : i32
    %c0_i32_0 = arith.constant 0 : i32
    %c0_i32_1 = arith.constant 0 : i32
    return %c0_i32, %c0_i32_0 : i32, i32
  }
  func.func @transform_5(%arg0: i32) -> (i32, i32) {
    %c0_i32 = arith.constant 0 : i32
    %c0_i32_0 = arith.constant 0 : i32
    %c0_i32_1 = arith.constant 0 : i32
    return %c0_i32, %c0_i32_0 : i32, i32
  }
  func.func @transform_6(%arg0: i32) -> (i32, i32) {
    %c0_i32 = arith.constant 0 : i32
    %c0_i32_0 = arith.constant 0 : i32
    %c0_i32_1 = arith.constant 0 : i32
    return %c0_i32, %c0_i32_0 : i32, i32
  }
  func.func @transform_7(%arg0: i32) -> (i32, i32) {
    %c0_i32 = arith.constant 0 : i32
    %c0_i32_0 = arith.constant 0 : i32
    return %c0_i32, %arg0 : i32, i32
  }
}

</mosaic_0001>

<llo_original>
// kernel: tpu_custom_call.1
$region0: #{tpu_custom_call.1}
  #allocation0 [shape = 'u32[]', space=smem, size = 0x4, offset = 0x4, fixed_abs, tag = 'smem constant byte address 0x4 - core index']
  #allocation1 [shape = 'u32[144,128]{1,0:T(1,128)}', space=vmem, size = 0x12000, scoped, tag = 'internal scratch']
  #allocation2 [shape = 'f32[1,1]{1,0:T(1,128)S(1)}', space=vmem, size = 0x200, scoped, tag = 'scoped memory for tpu_custom_call.1']
  %s0 = inlined_call_operand.vmem [shape: f32[1024,6], index: 0, kind: input, shape index: {}]
  %s1 = inlined_call_operand.vmem [shape: f32[32,6], index: 1, kind: input, shape index: {}]
  %s2 = inlined_call_operand.vmem [shape: f32[32,1], index: 2, kind: input, shape index: {}]
  %s3 = inlined_call_operand.vmem [shape: f32[32,32], index: 3, kind: input, shape index: {}]
  %s4 = inlined_call_operand.vmem [shape: f32[32,1], index: 4, kind: input, shape index: {}]
  %s5 = inlined_call_operand.vmem [shape: f32[1,32], index: 5, kind: input, shape index: {}]
  %s6 = inlined_call_operand.<no memory space> [shape: f32[1,1], index: 6, kind: input, shape index: {}]
  %s7 = inlined_call_operand.hbm [shape: f32[1,1024], index: 7, kind: output, shape index: {}]
  %s8 = sld [smem:[#allocation0]]
  $region38: #{tpu_custom_call.1} parent=0
    _
  %s10 = ssub.s32 1, %s8
  %s11 = scalar_select 0, %s10, %s8
  %v12 = vstv %s6
  %13 = vst [vmem:[#allocation2] sm:$0x1] %v12
  $region1: #{tpu_custom_call.1} parent=0
    #allocation3 [shape = 'u8[4096]{0}', space=vmem, size = 0x1000, scoped, tag = 'output window, operand 0, single buffered']
    #allocation4 [shape = 's32[1]{0}', space=sflag, size = 0x4, scoped, tag = 'scoped memory for tpu_custom_call.1']
    %14 = vsyncpa [#allocation4], 0
    // Predicated region
    $region2: #{tpu_custom_call.1} parent=1 // pred_check
      _
    $region3: #{tpu_custom_call.1} parent=1 // pred_check_branch
      %16 = sbr.rel (0) target = $region5
    $region4: #{tpu_custom_call.1} parent=1 // pred_region
      _
    $region5: #{tpu_custom_call.1} parent=1 // pred_fallthru
      _
    // Predicated region
    $region6: #{tpu_custom_call.1} parent=1 // pred_check
      _
    $region7: #{tpu_custom_call.1} parent=1 // pred_check_branch
      %18 = sbr.rel (0) target = $region9
    $region8: #{tpu_custom_call.1} parent=1 // pred_region
      _
    $region9: #{tpu_custom_call.1} parent=1 // pred_fallthru
      _
    // Predicated region
    $region10: #{tpu_custom_call.1} parent=1 // pred_check
      _
    $region11: #{tpu_custom_call.1} parent=1 // pred_check_branch
      %20 = sbr.rel (0) target = $region13
    $region12: #{tpu_custom_call.1} parent=1 // pred_region
      _
    $region13: #{tpu_custom_call.1} parent=1 // pred_fallthru
      _
    // Predicated region
    $region14: #{tpu_custom_call.1} parent=1 // pred_check
      _
    $region15: #{tpu_custom_call.1} parent=1 // pred_check_branch
      %22 = sbr.rel (0) target = $region17
    $region16: #{tpu_custom_call.1} parent=1 // pred_region
      _
    $region17: #{tpu_custom_call.1} parent=1 // pred_fallthru
      _
    // Predicated region
    $region18: #{tpu_custom_call.1} parent=1 // pred_check
      _
    $region19: #{tpu_custom_call.1} parent=1 // pred_check_branch
      %24 = sbr.rel (0) target = $region21
    $region20: #{tpu_custom_call.1} parent=1 // pred_region
      _
    $region21: #{tpu_custom_call.1} parent=1 // pred_fallthru
      _
    // Predicated region
    $region22: #{tpu_custom_call.1} parent=1 // pred_check
      _
    $region23: #{tpu_custom_call.1} parent=1 // pred_check_branch
      %26 = sbr.rel (0) target = $region25
    $region24: #{tpu_custom_call.1} parent=1 // pred_region
      _
    $region25: #{tpu_custom_call.1} parent=1 // pred_fallthru
      _
    // Predicated region
    $region26: #{tpu_custom_call.1} parent=1 // pred_check
      _
    $region27: #{tpu_custom_call.1} parent=1 // pred_check_branch
      %28 = sbr.rel (0) target = $region29
    $region28: #{tpu_custom_call.1} parent=1 // pred_region
      _
    $region29: #{tpu_custom_call.1} parent=1 // pred_fallthru
      _
    %v29 = vld [vmem:[%s0] sm:$0xff]
    %v30 = vld [vmem:[%s0 + $0x8] sm:$0xff]
    %v31 = vld [vmem:[%s0 + $0x10] sm:$0xff]
    %v32 = vld [vmem:[%s0 + $0x18] sm:$0xff]
    %v33 = vld [vmem:[%s0 + $0x20] sm:$0xff]
    %v34 = vld [vmem:[%s0 + $0x28] sm:$0xff]
    %v35 = vld [vmem:[%s0 + $0x30] sm:$0xff]
    %v36 = vld [vmem:[%s0 + $0x38] sm:$0xff]
    %v37 = vld [vmem:[%s0 + $0x40] sm:$0xff]
    %v38 = vld [vmem:[%s0 + $0x48] sm:$0xff]
    %v39 = vld [vmem:[%s0 + $0x50] sm:$0xff]
    %v40 = vld [vmem:[%s0 + $0x58] sm:$0xff]
    %v41 = vld [vmem:[%s0 + $0x60] sm:$0xff]
    %v42 = vld [vmem:[%s0 + $0x68] sm:$0xff]
    %v43 = vld [vmem:[%s0 + $0x70] sm:$0xff]
    %v44 = vld [vmem:[%s0 + $0x78] sm:$0xff]
    %v45 = vld [vmem:[%s0 + $0x80] sm:$0xff]
    %v46 = vld [vmem:[%s0 + $0x88] sm:$0xff]
    %v47 = vld [vmem:[%s0 + $0x90] sm:$0xff]
    %v48 = vld [vmem:[%s0 + $0x98] sm:$0xff]
    %v49 = vld [vmem:[%s0 + $0xa0] sm:$0xff]
    %v50 = vld [vmem:[%s0 + $0xa8] sm:$0xff]
    %v51 = vld [vmem:[%s0 + $0xb0] sm:$0xff]
    %v52 = vld [vmem:[%s0 + $0xb8] sm:$0xff]
    %v53 = vld [vmem:[%s0 + $0xc0] sm:$0xff]
    %v54 = vld [vmem:[%s0 + $0xc8] sm:$0xff]
    %v55 = vld [vmem:[%s0 + $0xd0] sm:$0xff]
    %v56 = vld [vmem:[%s0 + $0xd8] sm:$0xff]
    %v57 = vld [vmem:[%s0 + $0xe0] sm:$0xff]
    %v58 = vld [vmem:[%s0 + $0xe8] sm:$0xff]
    %v59 = vld [vmem:[%s0 + $0xf0] sm:$0xff]
    %v60 = vld [vmem:[%s0 + $0xf8] sm:$0xff]
    %v61 = vld [vmem:[%s0 + $0x100] sm:$0xff]
    %v62 = vld [vmem:[%s0 + $0x108] sm:$0xff]
    %v63 = vld [vmem:[%s0 + $0x110] sm:$0xff]
    %v64 = vld [vmem:[%s0 + $0x118] sm:$0xff]
    %v65 = vld [vmem:[%s0 + $0x120] sm:$0xff]
    %v66 = vld [vmem:[%s0 + $0x128] sm:$0xff]
    %v67 = vld [vmem:[%s0 + $0x130] sm:$0xff]
    %v68 = vld [vmem:[%s0 + $0x138] sm:$0xff]
    %v69 = vld [vmem:[%s0 + $0x140] sm:$0xff]
    %v70 = vld [vmem:[%s0 + $0x148] sm:$0xff]
    %v71 = vld [vmem:[%s0 + $0x150] sm:$0xff]
    %v72 = vld [vmem:[%s0 + $0x158] sm:$0xff]
    %v73 = vld [vmem:[%s0 + $0x160] sm:$0xff]
    %v74 = vld [vmem:[%s0 + $0x168] sm:$0xff]
    %v75 = vld [vmem:[%s0 + $0x170] sm:$0xff]
    %v76 = vld [vmem:[%s0 + $0x178] sm:$0xff]
    %v77 = vld [vmem:[%s0 + $0x180] sm:$0xff]
    %v78 = vld [vmem:[%s0 + $0x188] sm:$0xff]
    %v79 = vld [vmem:[%s0 + $0x190] sm:$0xff]
    %v80 = vld [vmem:[%s0 + $0x198] sm:$0xff]
    %v81 = vld [vmem:[%s0 + $0x1a0] sm:$0xff]
    %v82 = vld [vmem:[%s0 + $0x1a8] sm:$0xff]
    %v83 = vld [vmem:[%s0 + $0x1b0] sm:$0xff]
    %v84 = vld [vmem:[%s0 + $0x1b8] sm:$0xff]
    %v85 = vld [vmem:[%s0 + $0x1c0] sm:$0xff]
    %v86 = vld [vmem:[%s0 + $0x1c8] sm:$0xff]
    %v87 = vld [vmem:[%s0 + $0x1d0] sm:$0xff]
    %v88 = vld [vmem:[%s0 + $0x1d8] sm:$0xff]
    %v89 = vld [vmem:[%s0 + $0x1e0] sm:$0xff]
    %v90 = vld [vmem:[%s0 + $0x1e8] sm:$0xff]
    %v91 = vld [vmem:[%s0 + $0x1f0] sm:$0xff]
    %v92 = vld [vmem:[%s0 + $0x1f8] sm:$0xff]
    %v93 = vld [vmem:[%s0 + $0x200] sm:$0xff]
    %v94 = vld [vmem:[%s0 + $0x208] sm:$0xff]
    %v95 = vld [vmem:[%s0 + $0x210] sm:$0xff]
    %v96 = vld [vmem:[%s0 + $0x218] sm:$0xff]
    %v97 = vld [vmem:[%s0 + $0x220] sm:$0xff]
    %v98 = vld [vmem:[%s0 + $0x228] sm:$0xff]
    %v99 = vld [vmem:[%s0 + $0x230] sm:$0xff]
    %v100 = vld [vmem:[%s0 + $0x238] sm:$0xff]
    %v101 = vld [vmem:[%s0 + $0x240] sm:$0xff]
    %v102 = vld [vmem:[%s0 + $0x248] sm:$0xff]
    %v103 = vld [vmem:[%s0 + $0x250] sm:$0xff]
    %v104 = vld [vmem:[%s0 + $0x258] sm:$0xff]
    %v105 = vld [vmem:[%s0 + $0x260] sm:$0xff]
    %v106 = vld [vmem:[%s0 + $0x268] sm:$0xff]
    %v107 = vld [vmem:[%s0 + $0x270] sm:$0xff]
    %v108 = vld [vmem:[%s0 + $0x278] sm:$0xff]
    %v109 = vld [vmem:[%s0 + $0x280] sm:$0xff]
    %v110 = vld [vmem:[%s0 + $0x288] sm:$0xff]
    %v111 = vld [vmem:[%s0 + $0x290] sm:$0xff]
    %v112 = vld [vmem:[%s0 + $0x298] sm:$0xff]
    %v113 = vld [vmem:[%s0 + $0x2a0] sm:$0xff]
    %v114 = vld [vmem:[%s0 + $0x2a8] sm:$0xff]
    %v115 = vld [vmem:[%s0 + $0x2b0] sm:$0xff]
    %v116 = vld [vmem:[%s0 + $0x2b8] sm:$0xff]
    %v117 = vld [vmem:[%s0 + $0x2c0] sm:$0xff]
    %v118 = vld [vmem:[%s0 + $0x2c8] sm:$0xff]
    %v119 = vld [vmem:[%s0 + $0x2d0] sm:$0xff]
    %v120 = vld [vmem:[%s0 + $0x2d8] sm:$0xff]
    %v121 = vld [vmem:[%s0 + $0x2e0] sm:$0xff]
    %v122 = vld [vmem:[%s0 + $0x2e8] sm:$0xff]
    %v123 = vld [vmem:[%s0 + $0x2f0] sm:$0xff]
    %v124 = vld [vmem:[%s0 + $0x2f8] sm:$0xff]
    %v125 = vld [vmem:[%s0 + $0x300] sm:$0xff]
    %v126 = vld [vmem:[%s0 + $0x308] sm:$0xff]
    %v127 = vld [vmem:[%s0 + $0x310] sm:$0xff]
    %v128 = vld [vmem:[%s0 + $0x318] sm:$0xff]
    %v129 = vld [vmem:[%s0 + $0x320] sm:$0xff]
    %v130 = vld [vmem:[%s0 + $0x328] sm:$0xff]
    %v131 = vld [vmem:[%s0 + $0x330] sm:$0xff]
    %v132 = vld [vmem:[%s0 + $0x338] sm:$0xff]
    %v133 = vld [vmem:[%s0 + $0x340] sm:$0xff]
    %v134 = vld [vmem:[%s0 + $0x348] sm:$0xff]
    %v135 = vld [vmem:[%s0 + $0x350] sm:$0xff]
    %v136 = vld [vmem:[%s0 + $0x358] sm:$0xff]
    %v137 = vld [vmem:[%s0 + $0x360] sm:$0xff]
    %v138 = vld [vmem:[%s0 + $0x368] sm:$0xff]
    %v139 = vld [vmem:[%s0 + $0x370] sm:$0xff]
    %v140 = vld [vmem:[%s0 + $0x378] sm:$0xff]
    %v141 = vld [vmem:[%s0 + $0x380] sm:$0xff]
    %v142 = vld [vmem:[%s0 + $0x388] sm:$0xff]
    %v143 = vld [vmem:[%s0 + $0x390] sm:$0xff]
    %v144 = vld [vmem:[%s0 + $0x398] sm:$0xff]
    %v145 = vld [vmem:[%s0 + $0x3a0] sm:$0xff]
    %v146 = vld [vmem:[%s0 + $0x3a8] sm:$0xff]
    %v147 = vld [vmem:[%s0 + $0x3b0] sm:$0xff]
    %v148 = vld [vmem:[%s0 + $0x3b8] sm:$0xff]
    %v149 = vld [vmem:[%s0 + $0x3c0] sm:$0xff]
    %v150 = vld [vmem:[%s0 + $0x3c8] sm:$0xff]
    %v151 = vld [vmem:[%s0 + $0x3d0] sm:$0xff]
    %v152 = vld [vmem:[%s0 + $0x3d8] sm:$0xff]
    %v153 = vld [vmem:[%s0 + $0x3e0] sm:$0xff]
    %v154 = vld [vmem:[%s0 + $0x3e8] sm:$0xff]
    %v155 = vld [vmem:[%s0 + $0x3f0] sm:$0xff]
    %v156 = vld [vmem:[%s0 + $0x3f8] sm:$0xff]
    %v157 = vld [vmem:[%s1] sm:$0xff]
    %v158 = vld [vmem:[%s1 + $0x8] sm:$0xff]
    %v159 = vld [vmem:[%s1 + $0x10] sm:$0xff]
    %v160 = vld [vmem:[%s1 + $0x18] sm:$0xff]
    %v161 = vld [vmem:[%s2] sm:$0xff]
    %v162 = vld [vmem:[%s2 + $0x8] sm:$0xff]
    %v163 = vld [vmem:[%s2 + $0x10] sm:$0xff]
    %v164 = vld [vmem:[%s2 + $0x18] sm:$0xff]
    %166 = vset.pattern.permute.xlu0 0
    %167 = vperm.xlu0 %166, %v161
    %v168 = vpop.permute.xlu0 %167
    %171 = vset.pattern.permute.xlu0 0
    %172 = vperm.xlu0 %171, %v162
    %v173 = vpop.permute.xlu0 %172
    %176 = vset.pattern.permute.xlu0 0
    %177 = vperm.xlu0 %176, %v163
    %v178 = vpop.permute.xlu0 %177
    %181 = vset.pattern.permute.xlu0 0
    %182 = vperm.xlu0 %181, %v164
    %v183 = vpop.permute.xlu0 %182
    %vm185 = vcmask 48128
    %v187 = vsel %vm185, %v157, 0
    %v190 = vsel %vm185, %v158, 0
    %v193 = vsel %vm185, %v159, 0
    %v196 = vsel %vm185, %v160, 0
    %v199 = vsel %vm185, %v29, 0
    %v202 = vsel %vm185, %v30, 0
    %v205 = vsel %vm185, %v31, 0
    %v208 = vsel %vm185, %v32, 0
    %v211 = vsel %vm185, %v33, 0
    %v214 = vsel %vm185, %v34, 0
    %v217 = vsel %vm185, %v35, 0
    %v220 = vsel %vm185, %v36, 0
    %v223 = vsel %vm185, %v37, 0
    %v226 = vsel %vm185, %v38, 0
    %v229 = vsel %vm185, %v39, 0
    %v232 = vsel %vm185, %v40, 0
    %v235 = vsel %vm185, %v41, 0
    %v238 = vsel %vm185, %v42, 0
    %v241 = vsel %vm185, %v43, 0
    %v244 = vsel %vm185, %v44, 0
    %v247 = vsel %vm185, %v45, 0
    %v250 = vsel %vm185, %v46, 0
    %v253 = vsel %vm185, %v47, 0
    %v256 = vsel %vm185, %v48, 0
    %v259 = vsel %vm185, %v49, 0
    %v262 = vsel %vm185, %v50, 0
    %v265 = vsel %vm185, %v51, 0
    %v268 = vsel %vm185, %v52, 0
    %v271 = vsel %vm185, %v53, 0
    %v274 = vsel %vm185, %v54, 0
    %v277 = vsel %vm185, %v55, 0
    %v280 = vsel %vm185, %v56, 0
    %v283 = vsel %vm185, %v57, 0
    %v286 = vsel %vm185, %v58, 0
    %v289 = vsel %vm185, %v59, 0
    %v292 = vsel %vm185, %v60, 0
    %v295 = vsel %vm185, %v61, 0
    %v298 = vsel %vm185, %v62, 0
    %v301 = vsel %vm185, %v63, 0
    %v304 = vsel %vm185, %v64, 0
    %v307 = vsel %vm185, %v65, 0
    %v310 = vsel %vm185, %v66, 0
    %v313 = vsel %vm185, %v67, 0
    %v316 = vsel %vm185, %v68, 0
    %v319 = vsel %vm185, %v69, 0
    %v322 = vsel %vm185, %v70, 0
    %v325 = vsel %vm185, %v71, 0
    %v328 = vsel %vm185, %v72, 0
    %v331 = vsel %vm185, %v73, 0
    %v334 = vsel %vm185, %v74, 0
    %v337 = vsel %vm185, %v75, 0
    %v340 = vsel %vm185, %v76, 0
    %v343 = vsel %vm185, %v77, 0
    %v346 = vsel %vm185, %v78, 0
    %v349 = vsel %vm185, %v79, 0
    %v352 = vsel %vm185, %v80, 0
    %v355 = vsel %vm185, %v81, 0
    %v358 = vsel %vm185, %v82, 0
    %v361 = vsel %vm185, %v83, 0
    %v364 = vsel %vm185, %v84, 0
    %v367 = vsel %vm185, %v85, 0
    %v370 = vsel %vm185, %v86, 0
    %v373 = vsel %vm185, %v87, 0
    %v376 = vsel %vm185, %v88, 0
    %v379 = vsel %vm185, %v89, 0
    %v382 = vsel %vm185, %v90, 0
    %v385 = vsel %vm185, %v91, 0
    %v388 = vsel %vm185, %v92, 0
    %v391 = vsel %vm185, %v93, 0
    %v394 = vsel %vm185, %v94, 0
    %v397 = vsel %vm185, %v95, 0
    %v400 = vsel %vm185, %v96, 0
    %v403 = vsel %vm185, %v97, 0
    %v406 = vsel %vm185, %v98, 0
    %v409 = vsel %vm185, %v99, 0
    %v412 = vsel %vm185, %v100, 0
    %v415 = vsel %vm185, %v101, 0
    %v418 = vsel %vm185, %v102, 0
    %v421 = vsel %vm185, %v103, 0
    %v424 = vsel %vm185, %v104, 0
    %v427 = vsel %vm185, %v105, 0
    %v430 = vsel %vm185, %v106, 0
    %v433 = vsel %vm185, %v107, 0
    %v436 = vsel %vm185, %v108, 0
    %v439 = vsel %vm185, %v109, 0
    %v442 = vsel %vm185, %v110, 0
    %v445 = vsel %vm185, %v111, 0
    %v448 = vsel %vm185, %v112, 0
    %v451 = vsel %vm185, %v113, 0
    %v454 = vsel %vm185, %v114, 0
    %v457 = vsel %vm185, %v115, 0
    %v460 = vsel %vm185, %v116, 0
    %v463 = vsel %vm185, %v117, 0
    %v466 = vsel %vm185, %v118, 0
    %v469 = vsel %vm185, %v119, 0
    %v472 = vsel %vm185, %v120, 0
    %v475 = vsel %vm185, %v121, 0
    %v478 = vsel %vm185, %v122, 0
    %v481 = vsel %vm185, %v123, 0
    %v484 = vsel %vm185, %v124, 0
    %v487 = vsel %vm185, %v125, 0
    %v490 = vsel %vm185, %v126, 0
    %v493 = vsel %vm185, %v127, 0
    %v496 = vsel %vm185, %v128, 0
    %v499 = vsel %vm185, %v129, 0
    %v502 = vsel %vm185, %v130, 0
    %v505 = vsel %vm185, %v131, 0
    %v508 = vsel %vm185, %v132, 0
    %v511 = vsel %vm185, %v133, 0
    %v514 = vsel %vm185, %v134, 0
    %v517 = vsel %vm185, %v135, 0
    %v520 = vsel %vm185, %v136, 0
    %v523 = vsel %vm185, %v137, 0
    %v526 = vsel %vm185, %v138, 0
    %v529 = vsel %vm185, %v139, 0
    %v532 = vsel %vm185, %v140, 0
    %v535 = vsel %vm185, %v141, 0
    %v538 = vsel %vm185, %v142, 0
    %v541 = vsel %vm185, %v143, 0
    %v544 = vsel %vm185, %v144, 0
    %v547 = vsel %vm185, %v145, 0
    %v550 = vsel %vm185, %v146, 0
    %v553 = vsel %vm185, %v147, 0
    %v556 = vsel %vm185, %v148, 0
    %v559 = vsel %vm185, %v149, 0
    %v562 = vsel %vm185, %v150, 0
    %v565 = vsel %vm185, %v151, 0
    %v568 = vsel %vm185, %v152, 0
    %v571 = vsel %vm185, %v153, 0
    %v574 = vsel %vm185, %v154, 0
    %v577 = vsel %vm185, %v155, 0
    %v580 = vsel %vm185, %v156, 0
    %582 = vmatprep.subr.mxu0 0.0
    %583 = vmatpush1.xpose.msra.mxu0 %v199
    %584 = vmatprep.subr.mxu0 0.0
    %585 = vmatpush1.xpose.msra.mxu0 %v202
    %586 = vmatprep.subr.mxu0 0.0
    %587 = vmatpush1.xpose.msra.mxu0 %v205
    %588 = vmatprep.subr.mxu0 0.0
    %589 = vmatpush1.xpose.msra.mxu0 %v208
    %590 = vmatprep.subr.mxu0 0.0
    %591 = vmatpush1.xpose.msra.mxu0 %v211
    %592 = vmatprep.subr.mxu0 0.0
    %593 = vmatpush1.xpose.msra.mxu0 %v214
    %594 = vmatprep.subr.mxu0 0.0
    %595 = vmatpush1.xpose.msra.mxu0 %v217
    %596 = vmatprep.subr.mxu0 0.0
    %597 = vmatpush1.xpose.msra.mxu0 %v220
    %598 = vmatprep.subr.mxu0 0.0
    %599 = vmatpush1.xpose.msra.mxu0 %v223
    %600 = vmatprep.subr.mxu0 0.0
    %601 = vmatpush1.xpose.msra.mxu0 %v226
    %602 = vmatprep.subr.mxu0 0.0
    %603 = vmatpush1.xpose.msra.mxu0 %v229
    %604 = vmatprep.subr.mxu0 0.0
    %605 = vmatpush1.xpose.msra.mxu0 %v232
    %606 = vmatprep.subr.mxu0 0.0
    %607 = vmatpush1.xpose.msra.mxu0 %v235
    %608 = vmatprep.subr.mxu0 0.0
    %609 = vmatpush1.xpose.msra.mxu0 %v238
    %610 = vmatprep.subr.mxu0 0.0
    %611 = vmatpush1.xpose.msra.mxu0 %v241
    %612 = vmatprep.subr.mxu0 0.0
    %613 = vmatpush1.xpose.msra.mxu0 %v244
    %614 = vmatprep.subr.mxu0 0.0
    %615 = vmatpush1.xpose.msra.mxu0 %v247
    %616 = vmatprep.subr.mxu0 0.0
    %617 = vmatpush1.xpose.msra.mxu0 %v250
    %618 = vmatprep.subr.mxu0 0.0
    %619 = vmatpush1.xpose.msra.mxu0 %v253
    %620 = vmatprep.subr.mxu0 0.0
    %621 = vmatpush1.xpose.msra.mxu0 %v256
    %622 = vmatprep.subr.mxu0 0.0
    %623 = vmatpush1.xpose.msra.mxu0 %v259
    %624 = vmatprep.subr.mxu0 0.0
    %625 = vmatpush1.xpose.msra.mxu0 %v262
    %626 = vmatprep.subr.mxu0 0.0
    %627 = vmatpush1.xpose.msra.mxu0 %v265
    %628 = vmatprep.subr.mxu0 0.0
    %629 = vmatpush1.xpose.msra.mxu0 %v268
    %630 = vmatprep.subr.mxu0 0.0
    %631 = vmatpush1.xpose.msra.mxu0 %v271
    %632 = vmatprep.subr.mxu0 0.0
    %633 = vmatpush1.xpose.msra.mxu0 %v274
    %634 = vmatprep.subr.mxu0 0.0
    %635 = vmatpush1.xpose.msra.mxu0 %v277
    %636 = vmatprep.subr.mxu0 0.0
    %637 = vmatpush1.xpose.msra.mxu0 %v280
    %638 = vmatprep.subr.mxu0 0.0
    %639 = vmatpush1.xpose.msra.mxu0 %v283
    %640 = vmatprep.subr.mxu0 0.0
    %641 = vmatpush1.xpose.msra.mxu0 %v286
    %642 = vmatprep.subr.mxu0 0.0
    %643 = vmatpush1.xpose.msra.mxu0 %v289
    %644 = vmatprep.subr.mxu0 0.0
    %645 = vmatpush1.xpose.msra.mxu0 %v292
    %646 = vmatprep.mubr.f32.mxu0 0.0
    %647 = vmatmul.mubr.f32.gmra.mrb[0].mxu0 %v187
    %v648 = vpop.f32.mrb[0].mxu0
    %v649 = vadd.f32 %v168, %v648
    %v650 = vpop.f32.mrb[0].mxu0
    %v651 = vadd.f32 %v168, %v650
    %652 = vmatprep.mubr.f32.mxu0 0.0
    %653 = vmatmul.mubr.f32.gmra.mrb[0].mxu0 %v190
    %v654 = vpop.f32.mrb[0].mxu0
    %v655 = vadd.f32 %v173, %v654
    %v656 = vpop.f32.mrb[0].mxu0
    %v657 = vadd.f32 %v173, %v656
    %658 = vmatprep.mubr.f32.mxu0 0.0
    %659 = vmatmul.mubr.f32.gmra.mrb[0].mxu0 %v193
    %v660 = vpop.f32.mrb[0].mxu0
    %v661 = vadd.f32 %v178, %v660
    %v662 = vpop.f32.mrb[0].mxu0
    %v663 = vadd.f32 %v178, %v662
    %664 = vmatprep.mubr.f32.mxu0 0.0
    %665 = vmatmul.mubr.f32.gmra.mrb[0].mxu0 %v196
    %v666 = vpop.f32.mrb[0].mxu0
    %v667 = vadd.f32 %v183, %v666
    %v668 = vpop.f32.mrb[0].mxu0
    %v669 = vadd.f32 %v183, %v668
    %670 = vdwg.mxu0
    %671 = vmatprep.subr.mxu0 0.0
    %672 = vmatpush1.xpose.msra.mxu0 %v295
    %673 = vmatprep.subr.mxu0 0.0
    %674 = vmatpush1.xpose.msra.mxu0 %v298
    %675 = vmatprep.subr.mxu0 0.0
    %676 = vmatpush1.xpose.msra.mxu0 %v301
    %677 = vmatprep.subr.mxu0 0.0
    %678 = vmatpush1.xpose.msra.mxu0 %v304
    %679 = vmatprep.subr.mxu0 0.0
    %680 = vmatpush1.xpose.msra.mxu0 %v307
    %681 = vmatprep.subr.mxu0 0.0
    %682 = vmatpush1.xpose.msra.mxu0 %v310
    %683 = vmatprep.subr.mxu0 0.0
    %684 = vmatpush1.xpose.msra.mxu0 %v313
    %685 = vmatprep.subr.mxu0 0.0
    %686 = vmatpush1.xpose.msra.mxu0 %v316
    %687 = vmatprep.subr.mxu0 0.0
    %688 = vmatpush1.xpose.msra.mxu0 %v319
    %689 = vmatprep.subr.mxu0 0.0
    %690 = vmatpush1.xpose.msra.mxu0 %v322
    %691 = vmatprep.subr.mxu0 0.0
    %692 = vmatpush1.xpose.msra.mxu0 %v325
    %693 = vmatprep.subr.mxu0 0.0
    %694 = vmatpush1.xpose.msra.mxu0 %v328
    %695 = vmatprep.subr.mxu0 0.0
    %696 = vmatpush1.xpose.msra.mxu0 %v331
    %697 = vmatprep.subr.mxu0 0.0
    %698 = vmatpush1.xpose.msra.mxu0 %v334
    %699 = vmatprep.subr.mxu0 0.0
    %700 = vmatpush1.xpose.msra.mxu0 %v337
    %701 = vmatprep.subr.mxu0 0.0
    %702 = vmatpush1.xpose.msra.mxu0 %v340
    %703 = vmatprep.subr.mxu0 0.0
    %704 = vmatpush1.xpose.msra.mxu0 %v343
    %705 = vmatprep.subr.mxu0 0.0
    %706 = vmatpush1.xpose.msra.mxu0 %v346
    %707 = vmatprep.subr.mxu0 0.0
    %708 = vmatpush1.xpose.msra.mxu0 %v349
    %709 = vmatprep.subr.mxu0 0.0
    %710 = vmatpush1.xpose.msra.mxu0 %v352
    %711 = vmatprep.subr.mxu0 0.0
    %712 = vmatpush1.xpose.msra.mxu0 %v355
    %713 = vmatprep.subr.mxu0 0.0
    %714 = vmatpush1.xpose.msra.mxu0 %v358
    %715 = vmatprep.subr.mxu0 0.0
    %716 = vmatpush1.xpose.msra.mxu0 %v361
    %717 = vmatprep.subr.mxu0 0.0
    %718 = vmatpush1.xpose.msra.mxu0 %v364
    %719 = vmatprep.subr.mxu0 0.0
    %720 = vmatpush1.xpose.msra.mxu0 %v367
    %721 = vmatprep.subr.mxu0 0.0
    %722 = vmatpush1.xpose.msra.mxu0 %v370
    %723 = vmatprep.subr.mxu0 0.0
    %724 = vmatpush1.xpose.msra.mxu0 %v373
    %725 = vmatprep.subr.mxu0 0.0
    %726 = vmatpush1.xpose.msra.mxu0 %v376
    %727 = vmatprep.subr.mxu0 0.0
    %728 = vmatpush1.xpose.msra.mxu0 %v379
    %729 = vmatprep.subr.mxu0 0.0
    %730 = vmatpush1.xpose.msra.mxu0 %v382
    %731 = vmatprep.subr.mxu0 0.0
    %732 = vmatpush1.xpose.msra.mxu0 %v385
    %733 = vmatprep.subr.mxu0 0.0
    %734 = vmatpush1.xpose.msra.mxu0 %v388
    %735 = vmatprep.mubr.f32.mxu0 0.0
    %736 = vmatmul.mubr.f32.gmra.mrb[0].mxu0 %v187
    %v737 = vpop.f32.mrb[0].mxu0
    %v738 = vadd.f32 %v168, %v737
    %v739 = vpop.f32.mrb[0].mxu0
    %v740 = vadd.f32 %v168, %v739
    %741 = vmatprep.mubr.f32.mxu0 0.0
    %742 = vmatmul.mubr.f32.gmra.mrb[0].mxu0 %v190
    %v743 = vpop.f32.mrb[0].mxu0
    %v744 = vadd.f32 %v173, %v743
    %v745 = vpop.f32.mrb[0].mxu0
    %v746 = vadd.f32 %v173, %v745
    %747 = vmatprep.mubr.f32.mxu0 0.0
    %748 = vmatmul.mubr.f32.gmra.mrb[0].mxu0 %v193
    %v749 = vpop.f32.mrb[0].mxu0
    %v750 = vadd.f32 %v178, %v749
    %v751 = vpop.f32.mrb[0].mxu0
    %v752 = vadd.f32 %v178, %v751
    %753 = vmatprep.mubr.f32.mxu0 0.0
    %754 = vmatmul.mubr.f32.gmra.mrb[0].mxu0 %v196
    %v755 = vpop.f32.mrb[0].mxu0
    %v756 = vadd.f32 %v183, %v755
    %v757 = vpop.f32.mrb[0].mxu0
    %v758 = vadd.f32 %v183, %v757
    %759 = vdwg.mxu0
    %760 = vmatprep.subr.mxu0 0.0
    %761 = vmatpush1.xpose.msra.mxu0 %v391
    %762 = vmatprep.subr.mxu0 0.0
    %763 = vmatpush1.xpose.msra.mxu0 %v394
    %764 = vmatprep.subr.mxu0 0.0
    %765 = vmatpush1.xpose.msra.mxu0 %v397
    %766 = vmatprep.subr.mxu0 0.0
    %767 = vmatpush1.xpose.msra.mxu0 %v400
    %768 = vmatprep.subr.mxu0 0.0
    %769 = vmatpush1.xpose.msra.mxu0 %v403
    %770 = vmatprep.subr.mxu0 0.0
    %771 = vmatpush1.xpose.msra.mxu0 %v406
    %772 = vmatprep.subr.mxu0 0.0
    %773 = vmatpush1.xpose.msra.mxu0 %v409
    %774 = vmatprep.subr.mxu0 0.0
    %775 = vmatpush1.xpose.msra.mxu0 %v412
    %776 = vmatprep.subr.mxu0 0.0
    %777 = vmatpush1.xpose.msra.mxu0 %v415
    %778 = vmatprep.subr.mxu0 0.0
    %779 = vmatpush1.xpose.msra.mxu0 %v418
    %780 = vmatprep.subr.mxu0 0.0
    %781 = vmatpush1.xpose.msra.mxu0 %v421
    %782 = vmatprep.subr.mxu0 0.0
    %783 = vmatpush1.xpose.msra.mxu0 %v424
    %784 = vmatprep.subr.mxu0 0.0
    %785 = vmatpush1.xpose.msra.mxu0 %v427
    %786 = vmatprep.subr.mxu0 0.0
    %787 = vmatpush1.xpose.msra.mxu0 %v430
    %788 = vmatprep.subr.mxu0 0.0
    %789 = vmatpush1.xpose.msra.mxu0 %v433
    %790 = vmatprep.subr.mxu0 0.0
    %791 = vmatpush1.xpose.msra.mxu0 %v436
    %792 = vmatprep.subr.mxu0 0.0
    %793 = vmatpush1.xpose.msra.mxu0 %v439
    %794 = vmatprep.subr.mxu0 0.0
    %795 = vmatpush1.xpose.msra.mxu0 %v442
    %796 = vmatprep.subr.mxu0 0.0
    %797 = vmatpush1.xpose.msra.mxu0 %v445
    %798 = vmatprep.subr.mxu0 0.0
    %799 = vmatpush1.xpose.msra.mxu0 %v448
    %800 = vmatprep.subr.mxu0 0.0
    %801 = vmatpush1.xpose.msra.mxu0 %v451
    %802 = vmatprep.subr.mxu0 0.0
    %803 = vmatpush1.xpose.msra.mxu0 %v454
    %804 = vmatprep.subr.mxu0 0.0
    %805 = vmatpush1.xpose.msra.mxu0 %v457
    %806 = vmatprep.subr.mxu0 0.0
    %807 = vmatpush1.xpose.msra.mxu0 %v460
    %808 = vmatprep.subr.mxu0 0.0
    %809 = vmatpush1.xpose.msra.mxu0 %v463
    %810 = vmatprep.subr.mxu0 0.0
    %811 = vmatpush1.xpose.msra.mxu0 %v466
    %812 = vmatprep.subr.mxu0 0.0
    %813 = vmatpush1.xpose.msra.mxu0 %v469
    %814 = vmatprep.subr.mxu0 0.0
    %815 = vmatpush1.xpose.msra.mxu0 %v472
    %816 = vmatprep.subr.mxu0 0.0
    %817 = vmatpush1.xpose.msra.mxu0 %v475
    %818 = vmatprep.subr.mxu0 0.0
    %819 = vmatpush1.xpose.msra.mxu0 %v478
    %820 = vmatprep.subr.mxu0 0.0
    %821 = vmatpush1.xpose.msra.mxu0 %v481
    %822 = vmatprep.subr.mxu0 0.0
    %823 = vmatpush1.xpose.msra.mxu0 %v484
    %824 = vmatprep.mubr.f32.mxu0 0.0
    %825 = vmatmul.mubr.f32.gmra.mrb[0].mxu0 %v187
    %v826 = vpop.f32.mrb[0].mxu0
    %v827 = vadd.f32 %v168, %v826
    %v828 = vpop.f32.mrb[0].mxu0
    %v829 = vadd.f32 %v168, %v828
    %830 = vmatprep.mubr.f32.mxu0 0.0
    %831 = vmatmul.mubr.f32.gmra.mrb[0].mxu0 %v190
    %v832 = vpop.f32.mrb[0].mxu0
    %v833 = vadd.f32 %v173, %v832
    %v834 = vpop.f32.mrb[0].mxu0
    %v835 = vadd.f32 %v173, %v834
    %836 = vmatprep.mubr.f32.mxu0 0.0
    %837 = vmatmul.mubr.f32.gmra.mrb[0].mxu0 %v193
    %v838 = vpop.f32.mrb[0].mxu0
    %v839 = vadd.f32 %v178, %v838
    %v840 = vpop.f32.mrb[0].mxu0
    %v841 = vadd.f32 %v178, %v840
    %842 = vmatprep.mubr.f32.mxu0 0.0
    %843 = vmatmul.mubr.f32.gmra.mrb[0].mxu0 %v196
    %v844 = vpop.f32.mrb[0].mxu0
    %v845 = vadd.f32 %v183, %v844
    %v846 = vpop.f32.mrb[0].mxu0
    %v847 = vadd.f32 %v183, %v846
    %848 = vdwg.mxu0
    %849 = vmatprep.subr.mxu0 0.0
    %850 = vmatpush1.xpose.msra.mxu0 %v487
    %851 = vmatprep.subr.mxu0 0.0
    %852 = vmatpush1.xpose.msra.mxu0 %v490
    %853 = vmatprep.subr.mxu0 0.0
    %854 = vmatpush1.xpose.msra.mxu0 %v493
    %855 = vmatprep.subr.mxu0 0.0
    %856 = vmatpush1.xpose.msra.mxu0 %v496
    %857 = vmatprep.subr.mxu0 0.0
    %858 = vmatpush1.xpose.msra.mxu0 %v499
    %859 = vmatprep.subr.mxu0 0.0
    %860 = vmatpush1.xpose.msra.mxu0 %v502
    %861 = vmatprep.subr.mxu0 0.0
    %862 = vmatpush1.xpose.msra.mxu0 %v505
    %863 = vmatprep.subr.mxu0 0.0
    %864 = vmatpush1.xpose.msra.mxu0 %v508
    %865 = vmatprep.subr.mxu0 0.0
    %866 = vmatpush1.xpose.msra.mxu0 %v511
    %867 = vmatprep.subr.mxu0 0.0
    %868 = vmatpush1.xpose.msra.mxu0 %v514
    %869 = vmatprep.subr.mxu0 0.0
    %870 = vmatpush1.xpose.msra.mxu0 %v517
    %871 = vmatprep.subr.mxu0 0.0
    %872 = vmatpush1.xpose.msra.mxu0 %v520
    %873 = vmatprep.subr.mxu0 0.0
    %874 = vmatpush1.xpose.msra.mxu0 %v523
    %875 = vmatprep.subr.mxu0 0.0
    %876 = vmatpush1.xpose.msra.mxu0 %v526
    %877 = vmatprep.subr.mxu0 0.0
    %878 = vmatpush1.xpose.msra.mxu0 %v529
    %879 = vmatprep.subr.mxu0 0.0
    %880 = vmatpush1.xpose.msra.mxu0 %v532
    %881 = vmatprep.subr.mxu0 0.0
    %882 = vmatpush1.xpose.msra.mxu0 %v535
    %883 = vmatprep.subr.mxu0 0.0
    %884 = vmatpush1.xpose.msra.mxu0 %v538
    %885 = vmatprep.subr.mxu0 0.0
    %886 = vmatpush1.xpose.msra.mxu0 %v541
    %887 = vmatprep.subr.mxu0 0.0
    %888 = vmatpush1.xpose.msra.mxu0 %v544
    %889 = vmatprep.subr.mxu0 0.0
    %890 = vmatpush1.xpose.msra.mxu0 %v547
    %891 = vmatprep.subr.mxu0 0.0
    %892 = vmatpush1.xpose.msra.mxu0 %v550
    %893 = vmatprep.subr.mxu0 0.0
    %894 = vmatpush1.xpose.msra.mxu0 %v553
    %895 = vmatprep.subr.mxu0 0.0
    %896 = vmatpush1.xpose.msra.mxu0 %v556
    %897 = vmatprep.subr.mxu0 0.0
    %898 = vmatpush1.xpose.msra.mxu0 %v559
    %899 = vmatprep.subr.mxu0 0.0
    %900 = vmatpush1.xpose.msra.mxu0 %v562
    %901 = vmatprep.subr.mxu0 0.0
    %902 = vmatpush1.xpose.msra.mxu0 %v565
    %903 = vmatprep.subr.mxu0 0.0
    %904 = vmatpush1.xpose.msra.mxu0 %v568
    %905 = vmatprep.subr.mxu0 0.0
    %906 = vmatpush1.xpose.msra.mxu0 %v571
    %907 = vmatprep.subr.mxu0 0.0
    %908 = vmatpush1.xpose.msra.mxu0 %v574
    %909 = vmatprep.subr.mxu0 0.0
    %910 = vmatpush1.xpose.msra.mxu0 %v577
    %911 = vmatprep.subr.mxu0 0.0
    %912 = vmatpush1.xpose.msra.mxu0 %v580
    %913 = vmatprep.mubr.f32.mxu0 0.0
    %914 = vmatmul.mubr.f32.gmra.mrb[0].mxu0 %v187
    %v915 = vpop.f32.mrb[0].mxu0
    %v916 = vadd.f32 %v168, %v915
    %v917 = vpop.f32.mrb[0].mxu0
    %v918 = vadd.f32 %v168, %v917
    %919 = vmatprep.mubr.f32.mxu0 0.0
    %920 = vmatmul.mubr.f32.gmra.mrb[0].mxu0 %v190
    %v921 = vpop.f32.mrb[0].mxu0
    %v922 = vadd.f32 %v173, %v921
    %v923 = vpop.f32.mrb[0].mxu0
    %v924 = vadd.f32 %v173, %v923
    %925 = vmatprep.mubr.f32.mxu0 0.0
    %926 = vmatmul.mubr.f32.gmra.mrb[0].mxu0 %v193
    %v927 = vpop.f32.mrb[0].mxu0
    %v928 = vadd.f32 %v178, %v927
    %v929 = vpop.f32.mrb[0].mxu0
    %v930 = vadd.f32 %v178, %v929
    %931 = vmatprep.mubr.f32.mxu0 0.0
    %932 = vmatmul.mubr.f32.gmra.mrb[0].mxu0 %v196
    %v933 = vpop.f32.mrb[0].mxu0
    %v934 = vadd.f32 %v183, %v933
    %v935 = vpop.f32.mrb[0].mxu0
    %v936 = vadd.f32 %v183, %v935
    %937 = vdwg.mxu0
    %v938 = vmax.f32 %v649, 0.0
    %v939 = vmax.f32 %v651, 0.0
    %v940 = vmax.f32 %v738, 0.0
    %v941 = vmax.f32 %v740, 0.0
    %v942 = vmax.f32 %v827, 0.0
    %v943 = vmax.f32 %v829, 0.0
    %v944 = vmax.f32 %v916, 0.0
    %v945 = vmax.f32 %v918, 0.0
    %v946 = vmax.f32 %v655, 0.0
    %v947 = vmax.f32 %v657, 0.0
    %v948 = vmax.f32 %v744, 0.0
    %v949 = vmax.f32 %v746, 0.0
    %v950 = vmax.f32 %v833, 0.0
    %v951 = vmax.f32 %v835, 0.0
    %v952 = vmax.f32 %v922, 0.0
    %v953 = vmax.f32 %v924, 0.0
    %v954 = vmax.f32 %v661, 0.0
    %v955 = vmax.f32 %v663, 0.0
    %v956 = vmax.f32 %v750, 0.0
    %v957 = vmax.f32 %v752, 0.0
    %v958 = vmax.f32 %v839, 0.0
    %v959 = vmax.f32 %v841, 0.0
    %v960 = vmax.f32 %v928, 0.0
    %v961 = vmax.f32 %v930, 0.0
    %v962 = vmax.f32 %v667, 0.0
    %v963 = vmax.f32 %v669, 0.0
    %v964 = vmax.f32 %v756, 0.0
    %v965 = vmax.f32 %v758, 0.0
    %v966 = vmax.f32 %v845, 0.0
    %v967 = vmax.f32 %v847, 0.0
    %v968 = vmax.f32 %v934, 0.0
    %v969 = vmax.f32 %v936, 0.0
    %v970 = vld [vmem:[%s3] sm:$0xff]
    %v971 = vld [vmem:[%s3 + $0x8] sm:$0xff]
    %v972 = vld [vmem:[%s3 + $0x10] sm:$0xff]
    %v973 = vld [vmem:[%s3 + $0x18] sm:$0xff]
    %v974 = vld [vmem:[%s4] sm:$0xff]
    %v975 = vld [vmem:[%s4 + $0x8] sm:$0xff]
    %v976 = vld [vmem:[%s4 + $0x10] sm:$0xff]
    %v977 = vld [vmem:[%s4 + $0x18] sm:$0xff]
    %979 = vset.pattern.permute.xlu0 0
    %980 = vperm.xlu0 %979, %v974
    %v981 = vpop.permute.xlu0 %980
    %984 = vset.pattern.permute.xlu0 0
    %985 = vperm.xlu0 %984, %v975
    %v986 = vpop.permute.xlu0 %985
    %989 = vset.pattern.permute.xlu0 0
    %990 = vperm.xlu0 %989, %v976
    %v991 = vpop.permute.xlu0 %990
    %994 = vset.pattern.permute.xlu0 0
    %995 = vperm.xlu0 %994, %v977
    %v996 = vpop.permute.xlu0 %995
    %vm998 = vcmask 261120
    %v1000 = vsel %vm998, %v970, 0
    %v1003 = vsel %vm998, %v971, 0
    %v1006 = vsel %vm998, %v972, 0
    %v1009 = vsel %vm998, %v973, 0
    %1011 = vmatprep.subr.mxu0 %v939
    %1012 = vmatpush1.msra.mxu0 %v938
    %1013 = vmatprep.subr.mxu0 %v947
    %1014 = vmatpush1.msra.mxu0 %v946
    %1015 = vmatprep.subr.mxu0 %v955
    %1016 = vmatpush1.msra.mxu0 %v954
    %1017 = vmatprep.subr.mxu0 %v963
    %1018 = vmatpush1.msra.mxu0 %v962
    %1019 = vmatprep.subr.mxu0 0.0
    %1020 = vmatpush1.msra.mxu0 0.0
    %1021 = vmatprep.subr.mxu0 0.0
    %1022 = vmatpush1.msra.mxu0 0.0
    %1023 = vmatprep.subr.mxu0 0.0
    %1024 = vmatpush1.msra.mxu0 0.0
    %1025 = vmatprep.subr.mxu0 0.0
    %1026 = vmatpush1.msra.mxu0 0.0
    %1027 = vmatprep.subr.mxu0 0.0
    %1028 = vmatpush1.msra.mxu0 0.0
    %1029 = vmatprep.subr.mxu0 0.0
    %1030 = vmatpush1.msra.mxu0 0.0
    %1031 = vmatprep.subr.mxu0 0.0
    %1032 = vmatpush1.msra.mxu0 0.0
    %1033 = vmatprep.subr.mxu0 0.0
    %1034 = vmatpush1.msra.mxu0 0.0
    %1035 = vmatprep.subr.mxu0 0.0
    %1036 = vmatpush1.msra.mxu0 0.0
    %1037 = vmatprep.subr.mxu0 0.0
    %1038 = vmatpush1.msra.mxu0 0.0
    %1039 = vmatprep.subr.mxu0 0.0
    %1040 = vmatpush1.msra.mxu0 0.0
    %1041 = vmatprep.subr.mxu0 0.0
    %1042 = vmatpush1.msra.mxu0 0.0
    %1043 = vmatprep.subr.mxu0 0.0
    %1044 = vmatpush1.msra.mxu0 0.0
    %1045 = vmatprep.subr.mxu0 0.0
    %1046 = vmatpush1.msra.mxu0 0.0
    %1047 = vmatprep.subr.mxu0 0.0
    %1048 = vmatpush1.msra.mxu0 0.0
    %1049 = vmatprep.subr.mxu0 0.0
    %1050 = vmatpush1.msra.mxu0 0.0
    %1051 = vmatprep.subr.mxu0 0.0
    %1052 = vmatpush1.msra.mxu0 0.0
    %1053 = vmatprep.subr.mxu0 0.0
    %1054 = vmatpush1.msra.mxu0 0.0
    %1055 = vmatprep.subr.mxu0 0.0
    %1056 = vmatpush1.msra.mxu0 0.0
    %1057 = vmatprep.subr.mxu0 0.0
    %1058 = vmatpush1.msra.mxu0 0.0
    %1059 = vmatprep.subr.mxu0 0.0
    %1060 = vmatpush1.msra.mxu0 0.0
    %1061 = vmatprep.subr.mxu0 0.0
    %1062 = vmatpush1.msra.mxu0 0.0
    %1063 = vmatprep.subr.mxu0 0.0
    %1064 = vmatpush1.msra.mxu0 0.0
    %1065 = vmatprep.subr.mxu0 0.0
    %1066 = vmatpush1.msra.mxu0 0.0
    %1067 = vmatprep.subr.mxu0 0.0
    %1068 = vmatpush1.msra.mxu0 0.0
    %1069 = vmatprep.subr.mxu0 0.0
    %1070 = vmatpush1.msra.mxu0 0.0
    %1071 = vmatprep.subr.mxu0 0.0
    %1072 = vmatpush1.msra.mxu0 0.0
    %1073 = vmatprep.subr.mxu0 0.0
    %1074 = vmatpush1.msra.mxu0 0.0
    %1075 = vmatprep.mubr.f32.mxu0 0.0
    %1076 = vmatmul.mubr.f32.gmra.mrb[0].mxu0 %v1000
    %v1077 = vpop.f32.mrb[0].mxu0
    %v1078 = vadd.f32 %v981, %v1077
    %v1079 = vpop.f32.mrb[0].mxu0
    %v1080 = vadd.f32 %v981, %v1079
    %1081 = vmatprep.mubr.f32.mxu0 0.0
    %1082 = vmatmul.mubr.f32.gmra.mrb[0].mxu0 %v1003
    %v1083 = vpop.f32.mrb[0].mxu0
    %v1084 = vadd.f32 %v986, %v1083
    %v1085 = vpop.f32.mrb[0].mxu0
    %v1086 = vadd.f32 %v986, %v1085
    %1087 = vmatprep.mubr.f32.mxu0 0.0
    %1088 = vmatmul.mubr.f32.gmra.mrb[0].mxu0 %v1006
    %v1089 = vpop.f32.mrb[0].mxu0
    %v1090 = vadd.f32 %v991, %v1089
    %v1091 = vpop.f32.mrb[0].mxu0
    %v1092 = vadd.f32 %v991, %v1091
    %1093 = vmatprep.mubr.f32.mxu0 0.0
    %1094 = vmatmul.mubr.f32.gmra.mrb[0].mxu0 %v1009
    %v1095 = vpop.f32.mrb[0].mxu0
    %v1096 = vadd.f32 %v996, %v1095
    %v1097 = vpop.f32.mrb[0].mxu0
    %v1098 = vadd.f32 %v996, %v1097
    %1099 = vdwg.mxu0
    %1100 = vmatprep.subr.mxu0 %v941
    %1101 = vmatpush1.msra.mxu0 %v940
    %1102 = vmatprep.subr.mxu0 %v949
    %1103 = vmatpush1.msra.mxu0 %v948
    %1104 = vmatprep.subr.mxu0 %v957
    %1105 = vmatpush1.msra.mxu0 %v956
    %1106 = vmatprep.subr.mxu0 %v965
    %1107 = vmatpush1.msra.mxu0 %v964
    %1108 = vmatprep.subr.mxu0 0.0
    %1109 = vmatpush1.msra.mxu0 0.0
    %1110 = vmatprep.subr.mxu0 0.0
    %1111 = vmatpush1.msra.mxu0 0.0
    %1112 = vmatprep.subr.mxu0 0.0
    %1113 = vmatpush1.msra.mxu0 0.0
    %1114 = vmatprep.subr.mxu0 0.0
    %1115 = vmatpush1.msra.mxu0 0.0
    %1116 = vmatprep.subr.mxu0 0.0
    %1117 = vmatpush1.msra.mxu0 0.0
    %1118 = vmatprep.subr.mxu0 0.0
    %1119 = vmatpush1.msra.mxu0 0.0
    %1120 = vmatprep.subr.mxu0 0.0
    %1121 = vmatpush1.msra.mxu0 0.0
    %1122 = vmatprep.subr.mxu0 0.0
    %1123 = vmatpush1.msra.mxu0 0.0
    %1124 = vmatprep.subr.mxu0 0.0
    %1125 = vmatpush1.msra.mxu0 0.0
    %1126 = vmatprep.subr.mxu0 0.0
    %1127 = vmatpush1.msra.mxu0 0.0
    %1128 = vmatprep.subr.mxu0 0.0
    %1129 = vmatpush1.msra.mxu0 0.0
    %1130 = vmatprep.subr.mxu0 0.0
    %1131 = vmatpush1.msra.mxu0 0.0
    %1132 = vmatprep.subr.mxu0 0.0
    %1133 = vmatpush1.msra.mxu0 0.0
    %1134 = vmatprep.subr.mxu0 0.0
    %1135 = vmatpush1.msra.mxu0 0.0
    %1136 = vmatprep.subr.mxu0 0.0
    %1137 = vmatpush1.msra.mxu0 0.0
    %1138 = vmatprep.subr.mxu0 0.0
    %1139 = vmatpush1.msra.mxu0 0.0
    %1140 = vmatprep.subr.mxu0 0.0
    %1141 = vmatpush1.msra.mxu0 0.0
    %1142 = vmatprep.subr.mxu0 0.0
    %1143 = vmatpush1.msra.mxu0 0.0
    %1144 = vmatprep.subr.mxu0 0.0
    %1145 = vmatpush1.msra.mxu0 0.0
    %1146 = vmatprep.subr.mxu0 0.0
    %1147 = vmatpush1.msra.mxu0 0.0
    %1148 = vmatprep.subr.mxu0 0.0
    %1149 = vmatpush1.msra.mxu0 0.0
    %1150 = vmatprep.subr.mxu0 0.0
    %1151 = vmatpush1.msra.mxu0 0.0
    %1152 = vmatprep.subr.mxu0 0.0
    %1153 = vmatpush1.msra.mxu0 0.0
    %1154 = vmatprep.subr.mxu0 0.0
    %1155 = vmatpush1.msra.mxu0 0.0
    %1156 = vmatprep.subr.mxu0 0.0
    %1157 = vmatpush1.msra.mxu0 0.0
    %1158 = vmatprep.subr.mxu0 0.0
    %1159 = vmatpush1.msra.mxu0 0.0
    %1160 = vmatprep.subr.mxu0 0.0
    %1161 = vmatpush1.msra.mxu0 0.0
    %1162 = vmatprep.subr.mxu0 0.0
    %1163 = vmatpush1.msra.mxu0 0.0
    %1164 = vmatprep.mubr.f32.mxu0 0.0
    %1165 = vmatmul.mubr.f32.gmra.mrb[0].mxu0 %v1000
    %v1166 = vpop.f32.mrb[0].mxu0
    %v1167 = vadd.f32 %v981, %v1166
    %v1168 = vpop.f32.mrb[0].mxu0
    %v1169 = vadd.f32 %v981, %v1168
    %1170 = vmatprep.mubr.f32.mxu0 0.0
    %1171 = vmatmul.mubr.f32.gmra.mrb[0].mxu0 %v1003
    %v1172 = vpop.f32.mrb[0].mxu0
    %v1173 = vadd.f32 %v986, %v1172
    %v1174 = vpop.f32.mrb[0].mxu0
    %v1175 = vadd.f32 %v986, %v1174
    %1176 = vmatprep.mubr.f32.mxu0 0.0
    %1177 = vmatmul.mubr.f32.gmra.mrb[0].mxu0 %v1006
    %v1178 = vpop.f32.mrb[0].mxu0
    %v1179 = vadd.f32 %v991, %v1178
    %v1180 = vpop.f32.mrb[0].mxu0
    %v1181 = vadd.f32 %v991, %v1180
    %1182 = vmatprep.mubr.f32.mxu0 0.0
    %1183 = vmatmul.mubr.f32.gmra.mrb[0].mxu0 %v1009
    %v1184 = vpop.f32.mrb[0].mxu0
    %v1185 = vadd.f32 %v996, %v1184
    %v1186 = vpop.f32.mrb[0].mxu0
    %v1187 = vadd.f32 %v996, %v1186
    %1188 = vdwg.mxu0
    %1189 = vmatprep.subr.mxu0 %v943
    %1190 = vmatpush1.msra.mxu0 %v942
    %1191 = vmatprep.subr.mxu0 %v951
    %1192 = vmatpush1.msra.mxu0 %v950
    %1193 = vmatprep.subr.mxu0 %v959
    %1194 = vmatpush1.msra.mxu0 %v958
    %1195 = vmatprep.subr.mxu0 %v967
    %1196 = vmatpush1.msra.mxu0 %v966
    %1197 = vmatprep.subr.mxu0 0.0
    %1198 = vmatpush1.msra.mxu0 0.0
    %1199 = vmatprep.subr.mxu0 0.0
    %1200 = vmatpush1.msra.mxu0 0.0
    %1201 = vmatprep.subr.mxu0 0.0
    %1202 = vmatpush1.msra.mxu0 0.0
    %1203 = vmatprep.subr.mxu0 0.0
    %1204 = vmatpush1.msra.mxu0 0.0
    %1205 = vmatprep.subr.mxu0 0.0
    %1206 = vmatpush1.msra.mxu0 0.0
    %1207 = vmatprep.subr.mxu0 0.0
    %1208 = vmatpush1.msra.mxu0 0.0
    %1209 = vmatprep.subr.mxu0 0.0
    %1210 = vmatpush1.msra.mxu0 0.0
    %1211 = vmatprep.subr.mxu0 0.0
    %1212 = vmatpush1.msra.mxu0 0.0
    %1213 = vmatprep.subr.mxu0 0.0
    %1214 = vmatpush1.msra.mxu0 0.0
    %1215 = vmatprep.subr.mxu0 0.0
    %1216 = vmatpush1.msra.mxu0 0.0
    %1217 = vmatprep.subr.mxu0 0.0
    %1218 = vmatpush1.msra.mxu0 0.0
    %1219 = vmatprep.subr.mxu0 0.0
    %1220 = vmatpush1.msra.mxu0 0.0
    %1221 = vmatprep.subr.mxu0 0.0
    %1222 = vmatpush1.msra.mxu0 0.0
    %1223 = vmatprep.subr.mxu0 0.0
    %1224 = vmatpush1.msra.mxu0 0.0
    %1225 = vmatprep.subr.mxu0 0.0
    %1226 = vmatpush1.msra.mxu0 0.0
    %1227 = vmatprep.subr.mxu0 0.0
    %1228 = vmatpush1.msra.mxu0 0.0
    %1229 = vmatprep.subr.mxu0 0.0
    %1230 = vmatpush1.msra.mxu0 0.0
    %1231 = vmatprep.subr.mxu0 0.0
    %1232 = vmatpush1.msra.mxu0 0.0
    %1233 = vmatprep.subr.mxu0 0.0
    %1234 = vmatpush1.msra.mxu0 0.0
    %1235 = vmatprep.subr.mxu0 0.0
    %1236 = vmatpush1.msra.mxu0 0.0
    %1237 = vmatprep.subr.mxu0 0.0
    %1238 = vmatpush1.msra.mxu0 0.0
    %1239 = vmatprep.subr.mxu0 0.0
    %1240 = vmatpush1.msra.mxu0 0.0
    %1241 = vmatprep.subr.mxu0 0.0
    %1242 = vmatpush1.msra.mxu0 0.0
    %1243 = vmatprep.subr.mxu0 0.0
    %1244 = vmatpush1.msra.mxu0 0.0
    %1245 = vmatprep.subr.mxu0 0.0
    %1246 = vmatpush1.msra.mxu0 0.0
    %1247 = vmatprep.subr.mxu0 0.0
    %1248 = vmatpush1.msra.mxu0 0.0
    %1249 = vmatprep.subr.mxu0 0.0
    %1250 = vmatpush1.msra.mxu0 0.0
    %1251 = vmatprep.subr.mxu0 0.0
    %1252 = vmatpush1.msra.mxu0 0.0
    %1253 = vmatprep.mubr.f32.mxu0 0.0
    %1254 = vmatmul.mubr.f32.gmra.mrb[0].mxu0 %v1000
    %v1255 = vpop.f32.mrb[0].mxu0
    %v1256 = vadd.f32 %v981, %v1255
    %v1257 = vpop.f32.mrb[0].mxu0
    %v1258 = vadd.f32 %v981, %v1257
    %1259 = vmatprep.mubr.f32.mxu0 0.0
    %1260 = vmatmul.mubr.f32.gmra.mrb[0].mxu0 %v1003
    %v1261 = vpop.f32.mrb[0].mxu0
    %v1262 = vadd.f32 %v986, %v1261
    %v1263 = vpop.f32.mrb[0].mxu0
    %v1264 = vadd.f32 %v986, %v1263
    %1265 = vmatprep.mubr.f32.mxu0 0.0
    %1266 = vmatmul.mubr.f32.gmra.mrb[0].mxu0 %v1006
    %v1267 = vpop.f32.mrb[0].mxu0
    %v1268 = vadd.f32 %v991, %v1267
    %v1269 = vpop.f32.mrb[0].mxu0
    %v1270 = vadd.f32 %v991, %v1269
    %1271 = vmatprep.mubr.f32.mxu0 0.0
    %1272 = vmatmul.mubr.f32.gmra.mrb[0].mxu0 %v1009
    %v1273 = vpop.f32.mrb[0].mxu0
    %v1274 = vadd.f32 %v996, %v1273
    %v1275 = vpop.f32.mrb[0].mxu0
    %v1276 = vadd.f32 %v996, %v1275
    %1277 = vdwg.mxu0
    %1278 = vmatprep.subr.mxu0 %v945
    %1279 = vmatpush1.msra.mxu0 %v944
    %1280 = vmatprep.subr.mxu0 %v953
    %1281 = vmatpush1.msra.mxu0 %v952
    %1282 = vmatprep.subr.mxu0 %v961
    %1283 = vmatpush1.msra.mxu0 %v960
    %1284 = vmatprep.subr.mxu0 %v969
    %1285 = vmatpush1.msra.mxu0 %v968
    %1286 = vmatprep.subr.mxu0 0.0
    %1287 = vmatpush1.msra.mxu0 0.0
    %1288 = vmatprep.subr.mxu0 0.0
    %1289 = vmatpush1.msra.mxu0 0.0
    %1290 = vmatprep.subr.mxu0 0.0
    %1291 = vmatpush1.msra.mxu0 0.0
    %1292 = vmatprep.subr.mxu0 0.0
    %1293 = vmatpush1.msra.mxu0 0.0
    %1294 = vmatprep.subr.mxu0 0.0
    %1295 = vmatpush1.msra.mxu0 0.0
    %1296 = vmatprep.subr.mxu0 0.0
    %1297 = vmatpush1.msra.mxu0 0.0
    %1298 = vmatprep.subr.mxu0 0.0
    %1299 = vmatpush1.msra.mxu0 0.0
    %1300 = vmatprep.subr.mxu0 0.0
    %1301 = vmatpush1.msra.mxu0 0.0
    %1302 = vmatprep.subr.mxu0 0.0
    %1303 = vmatpush1.msra.mxu0 0.0
    %1304 = vmatprep.subr.mxu0 0.0
    %1305 = vmatpush1.msra.mxu0 0.0
    %1306 = vmatprep.subr.mxu0 0.0
    %1307 = vmatpush1.msra.mxu0 0.0
    %1308 = vmatprep.subr.mxu0 0.0
    %1309 = vmatpush1.msra.mxu0 0.0
    %1310 = vmatprep.subr.mxu0 0.0
    %1311 = vmatpush1.msra.mxu0 0.0
    %1312 = vmatprep.subr.mxu0 0.0
    %1313 = vmatpush1.msra.mxu0 0.0
    %1314 = vmatprep.subr.mxu0 0.0
    %1315 = vmatpush1.msra.mxu0 0.0
    %1316 = vmatprep.subr.mxu0 0.0
    %1317 = vmatpush1.msra.mxu0 0.0
    %1318 = vmatprep.subr.mxu0 0.0
    %1319 = vmatpush1.msra.mxu0 0.0
    %1320 = vmatprep.subr.mxu0 0.0
    %1321 = vmatpush1.msra.mxu0 0.0
    %1322 = vmatprep.subr.mxu0 0.0
    %1323 = vmatpush1.msra.mxu0 0.0
    %1324 = vmatprep.subr.mxu0 0.0
    %1325 = vmatpush1.msra.mxu0 0.0
    %1326 = vmatprep.subr.mxu0 0.0
    %1327 = vmatpush1.msra.mxu0 0.0
    %1328 = vmatprep.subr.mxu0 0.0
    %1329 = vmatpush1.msra.mxu0 0.0
    %1330 = vmatprep.subr.mxu0 0.0
    %1331 = vmatpush1.msra.mxu0 0.0
    %1332 = vmatprep.subr.mxu0 0.0
    %1333 = vmatpush1.msra.mxu0 0.0
    %1334 = vmatprep.subr.mxu0 0.0
    %1335 = vmatpush1.msra.mxu0 0.0
    %1336 = vmatprep.subr.mxu0 0.0
    %1337 = vmatpush1.msra.mxu0 0.0
    %1338 = vmatprep.subr.mxu0 0.0
    %1339 = vmatpush1.msra.mxu0 0.0
    %1340 = vmatprep.subr.mxu0 0.0
    %1341 = vmatpush1.msra.mxu0 0.0
    %1342 = vmatprep.mubr.f32.mxu0 0.0
    %1343 = vmatmul.mubr.f32.gmra.mrb[0].mxu0 %v1000
    %v1344 = vpop.f32.mrb[0].mxu0
    %v1345 = vadd.f32 %v981, %v1344
    %v1346 = vpop.f32.mrb[0].mxu0
    %v1347 = vadd.f32 %v981, %v1346
    %1348 = vmatprep.mubr.f32.mxu0 0.0
    %1349 = vmatmul.mubr.f32.gmra.mrb[0].mxu0 %v1003
    %v1350 = vpop.f32.mrb[0].mxu0
    %v1351 = vadd.f32 %v986, %v1350
    %v1352 = vpop.f32.mrb[0].mxu0
    %v1353 = vadd.f32 %v986, %v1352
    %1354 = vmatprep.mubr.f32.mxu0 0.0
    %1355 = vmatmul.mubr.f32.gmra.mrb[0].mxu0 %v1006
    %v1356 = vpop.f32.mrb[0].mxu0
    %v1357 = vadd.f32 %v991, %v1356
    %v1358 = vpop.f32.mrb[0].mxu0
    %v1359 = vadd.f32 %v991, %v1358
    %1360 = vmatprep.mubr.f32.mxu0 0.0
    %1361 = vmatmul.mubr.f32.gmra.mrb[0].mxu0 %v1009
    %v1362 = vpop.f32.mrb[0].mxu0
    %v1363 = vadd.f32 %v996, %v1362
    %v1364 = vpop.f32.mrb[0].mxu0
    %v1365 = vadd.f32 %v996, %v1364
    %1366 = vdwg.mxu0
    %v1367 = vmax.f32 %v1078, 0.0
    %v1368 = vmax.f32 %v1080, 0.0
    %v1369 = vmax.f32 %v1167, 0.0
    %v1370 = vmax.f32 %v1169, 0.0
    %v1371 = vmax.f32 %v1256, 0.0
    %v1372 = vmax.f32 %v1258, 0.0
    %v1373 = vmax.f32 %v1345, 0.0
    %v1374 = vmax.f32 %v1347, 0.0
    %v1375 = vmax.f32 %v1084, 0.0
    %v1376 = vmax.f32 %v1086, 0.0
    %v1377 = vmax.f32 %v1173, 0.0
    %v1378 = vmax.f32 %v1175, 0.0
    %v1379 = vmax.f32 %v1262, 0.0
    %v1380 = vmax.f32 %v1264, 0.0
    %v1381 = vmax.f32 %v1351, 0.0
    %v1382 = vmax.f32 %v1353, 0.0
    %v1383 = vmax.f32 %v1090, 0.0
    %v1384 = vmax.f32 %v1092, 0.0
    %v1385 = vmax.f32 %v1179, 0.0
    %v1386 = vmax.f32 %v1181, 0.0
    %v1387 = vmax.f32 %v1268, 0.0
    %v1388 = vmax.f32 %v1270, 0.0
    %v1389 = vmax.f32 %v1357, 0.0
    %v1390 = vmax.f32 %v1359, 0.0
    %v1391 = vmax.f32 %v1096, 0.0
    %v1392 = vmax.f32 %v1098, 0.0
    %v1393 = vmax.f32 %v1185, 0.0
    %v1394 = vmax.f32 %v1187, 0.0
    %v1395 = vmax.f32 %v1274, 0.0
    %v1396 = vmax.f32 %v1276, 0.0
    %v1397 = vmax.f32 %v1363, 0.0
    %v1398 = vmax.f32 %v1365, 0.0
    %v1399 = vld [vmem:[%s5] sm:$0x1]
    %v1400 = vld [vmem:[#allocation2] sm:$0x1]
    %1402 = vset.pattern.permute.xlu0 0
    %1403 = vperm.xlu0 %1402, %v1400
    %v1404 = vpop.permute.xlu0 %1403
    %v1406 = vlaneseq
    %v1407 = vshrl.u32 %v1406, 7
    %v1408 = vsub.s32 0, %v1407
    %v1409 = vrot.slane %v1404, %v1408
    %v1411 = vsel %vm998, %v1399, 0
    %1413 = vmatprep.subr.mxu0 %v1368
    %1414 = vmatpush1.msra.mxu0 %v1367
    %1415 = vmatprep.subr.mxu0 %v1376
    %1416 = vmatpush1.msra.mxu0 %v1375
    %1417 = vmatprep.subr.mxu0 %v1384
    %1418 = vmatpush1.msra.mxu0 %v1383
    %1419 = vmatprep.subr.mxu0 %v1392
    %1420 = vmatpush1.msra.mxu0 %v1391
    %1421 = vmatprep.subr.mxu0 0.0
    %1422 = vmatpush1.msra.mxu0 0.0
    %1423 = vmatprep.subr.mxu0 0.0
    %1424 = vmatpush1.msra.mxu0 0.0
    %1425 = vmatprep.subr.mxu0 0.0
    %1426 = vmatpush1.msra.mxu0 0.0
    %1427 = vmatprep.subr.mxu0 0.0
    %1428 = vmatpush1.msra.mxu0 0.0
    %1429 = vmatprep.subr.mxu0 0.0
    %1430 = vmatpush1.msra.mxu0 0.0
    %1431 = vmatprep.subr.mxu0 0.0
    %1432 = vmatpush1.msra.mxu0 0.0
    %1433 = vmatprep.subr.mxu0 0.0
    %1434 = vmatpush1.msra.mxu0 0.0
    %1435 = vmatprep.subr.mxu0 0.0
    %1436 = vmatpush1.msra.mxu0 0.0
    %1437 = vmatprep.subr.mxu0 0.0
    %1438 = vmatpush1.msra.mxu0 0.0
    %1439 = vmatprep.subr.mxu0 0.0
    %1440 = vmatpush1.msra.mxu0 0.0
    %1441 = vmatprep.subr.mxu0 0.0
    %1442 = vmatpush1.msra.mxu0 0.0
    %1443 = vmatprep.subr.mxu0 0.0
    %1444 = vmatpush1.msra.mxu0 0.0
    %1445 = vmatprep.subr.mxu0 0.0
    %1446 = vmatpush1.msra.mxu0 0.0
    %1447 = vmatprep.subr.mxu0 0.0
    %1448 = vmatpush1.msra.mxu0 0.0
    %1449 = vmatprep.subr.mxu0 0.0
    %1450 = vmatpush1.msra.mxu0 0.0
    %1451 = vmatprep.subr.mxu0 0.0
    %1452 = vmatpush1.msra.mxu0 0.0
    %1453 = vmatprep.subr.mxu0 0.0
    %1454 = vmatpush1.msra.mxu0 0.0
    %1455 = vmatprep.subr.mxu0 0.0
    %1456 = vmatpush1.msra.mxu0 0.0
    %1457 = vmatprep.subr.mxu0 0.0
    %1458 = vmatpush1.msra.mxu0 0.0
    %1459 = vmatprep.subr.mxu0 0.0
    %1460 = vmatpush1.msra.mxu0 0.0
    %1461 = vmatprep.subr.mxu0 0.0
    %1462 = vmatpush1.msra.mxu0 0.0
    %1463 = vmatprep.subr.mxu0 0.0
    %1464 = vmatpush1.msra.mxu0 0.0
    %1465 = vmatprep.subr.mxu0 0.0
    %1466 = vmatpush1.msra.mxu0 0.0
    %1467 = vmatprep.subr.mxu0 0.0
    %1468 = vmatpush1.msra.mxu0 0.0
    %1469 = vmatprep.subr.mxu0 0.0
    %1470 = vmatpush1.msra.mxu0 0.0
    %1471 = vmatprep.subr.mxu0 0.0
    %1472 = vmatpush1.msra.mxu0 0.0
    %1473 = vmatprep.subr.mxu0 0.0
    %1474 = vmatpush1.msra.mxu0 0.0
    %1475 = vmatprep.subr.mxu0 0.0
    %1476 = vmatpush1.msra.mxu0 0.0
    %1477 = vmatprep.mubr.f32.mxu0 0.0
    %1478 = vmatmul.mubr.f32.gmra.mrb[0].mxu0 %v1411
    %v1479 = vpop.f32.mrb[0].mxu0
    %v1480 = vadd.f32 %v1409, %v1479
    %v1481 = vpop.f32.mrb[0].mxu0
    %v1482 = vadd.f32 %v1409, %v1481
    %1483 = vdwg.mxu0
    %1484 = vmatprep.subr.mxu0 %v1370
    %1485 = vmatpush1.msra.mxu0 %v1369
    %1486 = vmatprep.subr.mxu0 %v1378
    %1487 = vmatpush1.msra.mxu0 %v1377
    %1488 = vmatprep.subr.mxu0 %v1386
    %1489 = vmatpush1.msra.mxu0 %v1385
    %1490 = vmatprep.subr.mxu0 %v1394
    %1491 = vmatpush1.msra.mxu0 %v1393
    %1492 = vmatprep.subr.mxu0 0.0
    %1493 = vmatpush1.msra.mxu0 0.0
    %1494 = vmatprep.subr.mxu0 0.0
    %1495 = vmatpush1.msra.mxu0 0.0
    %1496 = vmatprep.subr.mxu0 0.0
    %1497 = vmatpush1.msra.mxu0 0.0
    %1498 = vmatprep.subr.mxu0 0.0
    %1499 = vmatpush1.msra.mxu0 0.0
    %1500 = vmatprep.subr.mxu0 0.0
    %1501 = vmatpush1.msra.mxu0 0.0
    %1502 = vmatprep.subr.mxu0 0.0
    %1503 = vmatpush1.msra.mxu0 0.0
    %1504 = vmatprep.subr.mxu0 0.0
    %1505 = vmatpush1.msra.mxu0 0.0
    %1506 = vmatprep.subr.mxu0 0.0
    %1507 = vmatpush1.msra.mxu0 0.0
    %1508 = vmatprep.subr.mxu0 0.0
    %1509 = vmatpush1.msra.mxu0 0.0
    %1510 = vmatprep.subr.mxu0 0.0
    %1511 = vmatpush1.msra.mxu0 0.0
    %1512 = vmatprep.subr.mxu0 0.0
    %1513 = vmatpush1.msra.mxu0 0.0
    %1514 = vmatprep.subr.mxu0 0.0
    %1515 = vmatpush1.msra.mxu0 0.0
    %1516 = vmatprep.subr.mxu0 0.0
    %1517 = vmatpush1.msra.mxu0 0.0
    %1518 = vmatprep.subr.mxu0 0.0
    %1519 = vmatpush1.msra.mxu0 0.0
    %1520 = vmatprep.subr.mxu0 0.0
    %1521 = vmatpush1.msra.mxu0 0.0
    %1522 = vmatprep.subr.mxu0 0.0
    %1523 = vmatpush1.msra.mxu0 0.0
    %1524 = vmatprep.subr.mxu0 0.0
    %1525 = vmatpush1.msra.mxu0 0.0
    %1526 = vmatprep.subr.mxu0 0.0
    %1527 = vmatpush1.msra.mxu0 0.0
    %1528 = vmatprep.subr.mxu0 0.0
    %1529 = vmatpush1.msra.mxu0 0.0
    %1530 = vmatprep.subr.mxu0 0.0
    %1531 = vmatpush1.msra.mxu0 0.0
    %1532 = vmatprep.subr.mxu0 0.0
    %1533 = vmatpush1.msra.mxu0 0.0
    %1534 = vmatprep.subr.mxu0 0.0
    %1535 = vmatpush1.msra.mxu0 0.0
    %1536 = vmatprep.subr.mxu0 0.0
    %1537 = vmatpush1.msra.mxu0 0.0
    %1538 = vmatprep.subr.mxu0 0.0
    %1539 = vmatpush1.msra.mxu0 0.0
    %1540 = vmatprep.subr.mxu0 0.0
    %1541 = vmatpush1.msra.mxu0 0.0
    %1542 = vmatprep.subr.mxu0 0.0
    %1543 = vmatpush1.msra.mxu0 0.0
    %1544 = vmatprep.subr.mxu0 0.0
    %1545 = vmatpush1.msra.mxu0 0.0
    %1546 = vmatprep.subr.mxu0 0.0
    %1547 = vmatpush1.msra.mxu0 0.0
    %1548 = vmatprep.mubr.f32.mxu0 0.0
    %1549 = vmatmul.mubr.f32.gmra.mrb[0].mxu0 %v1411
    %v1550 = vpop.f32.mrb[0].mxu0
    %v1551 = vadd.f32 %v1409, %v1550
    %v1552 = vpop.f32.mrb[0].mxu0
    %v1553 = vadd.f32 %v1409, %v1552
    %1554 = vdwg.mxu0
    %1555 = vmatprep.subr.mxu0 %v1372
    %1556 = vmatpush1.msra.mxu0 %v1371
    %1557 = vmatprep.subr.mxu0 %v1380
    %1558 = vmatpush1.msra.mxu0 %v1379
    %1559 = vmatprep.subr.mxu0 %v1388
    %1560 = vmatpush1.msra.mxu0 %v1387
    %1561 = vmatprep.subr.mxu0 %v1396
    %1562 = vmatpush1.msra.mxu0 %v1395
    %1563 = vmatprep.subr.mxu0 0.0
    %1564 = vmatpush1.msra.mxu0 0.0
    %1565 = vmatprep.subr.mxu0 0.0
    %1566 = vmatpush1.msra.mxu0 0.0
    %1567 = vmatprep.subr.mxu0 0.0
    %1568 = vmatpush1.msra.mxu0 0.0
    %1569 = vmatprep.subr.mxu0 0.0
    %1570 = vmatpush1.msra.mxu0 0.0
    %1571 = vmatprep.subr.mxu0 0.0
    %1572 = vmatpush1.msra.mxu0 0.0
    %1573 = vmatprep.subr.mxu0 0.0
    %1574 = vmatpush1.msra.mxu0 0.0
    %1575 = vmatprep.subr.mxu0 0.0
    %1576 = vmatpush1.msra.mxu0 0.0
    %1577 = vmatprep.subr.mxu0 0.0
    %1578 = vmatpush1.msra.mxu0 0.0
    %1579 = vmatprep.subr.mxu0 0.0
    %1580 = vmatpush1.msra.mxu0 0.0
    %1581 = vmatprep.subr.mxu0 0.0
    %1582 = vmatpush1.msra.mxu0 0.0
    %1583 = vmatprep.subr.mxu0 0.0
    %1584 = vmatpush1.msra.mxu0 0.0
    %1585 = vmatprep.subr.mxu0 0.0
    %1586 = vmatpush1.msra.mxu0 0.0
    %1587 = vmatprep.subr.mxu0 0.0
    %1588 = vmatpush1.msra.mxu0 0.0
    %1589 = vmatprep.subr.mxu0 0.0
    %1590 = vmatpush1.msra.mxu0 0.0
    %1591 = vmatprep.subr.mxu0 0.0
    %1592 = vmatpush1.msra.mxu0 0.0
    %1593 = vmatprep.subr.mxu0 0.0
    %1594 = vmatpush1.msra.mxu0 0.0
    %1595 = vmatprep.subr.mxu0 0.0
    %1596 = vmatpush1.msra.mxu0 0.0
    %1597 = vmatprep.subr.mxu0 0.0
    %1598 = vmatpush1.msra.mxu0 0.0
    %1599 = vmatprep.subr.mxu0 0.0
    %1600 = vmatpush1.msra.mxu0 0.0
    %1601 = vmatprep.subr.mxu0 0.0
    %1602 = vmatpush1.msra.mxu0 0.0
    %1603 = vmatprep.subr.mxu0 0.0
    %1604 = vmatpush1.msra.mxu0 0.0
    %1605 = vmatprep.subr.mxu0 0.0
    %1606 = vmatpush1.msra.mxu0 0.0
    %1607 = vmatprep.subr.mxu0 0.0
    %1608 = vmatpush1.msra.mxu0 0.0
    %1609 = vmatprep.subr.mxu0 0.0
    %1610 = vmatpush1.msra.mxu0 0.0
    %1611 = vmatprep.subr.mxu0 0.0
    %1612 = vmatpush1.msra.mxu0 0.0
    %1613 = vmatprep.subr.mxu0 0.0
    %1614 = vmatpush1.msra.mxu0 0.0
    %1615 = vmatprep.subr.mxu0 0.0
    %1616 = vmatpush1.msra.mxu0 0.0
    %1617 = vmatprep.subr.mxu0 0.0
    %1618 = vmatpush1.msra.mxu0 0.0
    %1619 = vmatprep.mubr.f32.mxu0 0.0
    %1620 = vmatmul.mubr.f32.gmra.mrb[0].mxu0 %v1411
    %v1621 = vpop.f32.mrb[0].mxu0
    %v1622 = vadd.f32 %v1409, %v1621
    %v1623 = vpop.f32.mrb[0].mxu0
    %v1624 = vadd.f32 %v1409, %v1623
    %1625 = vdwg.mxu0
    %1626 = vmatprep.subr.mxu0 %v1374
    %1627 = vmatpush1.msra.mxu0 %v1373
    %1628 = vmatprep.subr.mxu0 %v1382
    %1629 = vmatpush1.msra.mxu0 %v1381
    %1630 = vmatprep.subr.mxu0 %v1390
    %1631 = vmatpush1.msra.mxu0 %v1389
    %1632 = vmatprep.subr.mxu0 %v1398
    %1633 = vmatpush1.msra.mxu0 %v1397
    %1634 = vmatprep.subr.mxu0 0.0
    %1635 = vmatpush1.msra.mxu0 0.0
    %1636 = vmatprep.subr.mxu0 0.0
    %1637 = vmatpush1.msra.mxu0 0.0
    %1638 = vmatprep.subr.mxu0 0.0
    %1639 = vmatpush1.msra.mxu0 0.0
    %1640 = vmatprep.subr.mxu0 0.0
    %1641 = vmatpush1.msra.mxu0 0.0
    %1642 = vmatprep.subr.mxu0 0.0
    %1643 = vmatpush1.msra.mxu0 0.0
    %1644 = vmatprep.subr.mxu0 0.0
    %1645 = vmatpush1.msra.mxu0 0.0
    %1646 = vmatprep.subr.mxu0 0.0
    %1647 = vmatpush1.msra.mxu0 0.0
    %1648 = vmatprep.subr.mxu0 0.0
    %1649 = vmatpush1.msra.mxu0 0.0
    %1650 = vmatprep.subr.mxu0 0.0
    %1651 = vmatpush1.msra.mxu0 0.0
    %1652 = vmatprep.subr.mxu0 0.0
    %1653 = vmatpush1.msra.mxu0 0.0
    %1654 = vmatprep.subr.mxu0 0.0
    %1655 = vmatpush1.msra.mxu0 0.0
    %1656 = vmatprep.subr.mxu0 0.0
    %1657 = vmatpush1.msra.mxu0 0.0
    %1658 = vmatprep.subr.mxu0 0.0
    %1659 = vmatpush1.msra.mxu0 0.0
    %1660 = vmatprep.subr.mxu0 0.0
    %1661 = vmatpush1.msra.mxu0 0.0
    %1662 = vmatprep.subr.mxu0 0.0
    %1663 = vmatpush1.msra.mxu0 0.0
    %1664 = vmatprep.subr.mxu0 0.0
    %1665 = vmatpush1.msra.mxu0 0.0
    %1666 = vmatprep.subr.mxu0 0.0
    %1667 = vmatpush1.msra.mxu0 0.0
    %1668 = vmatprep.subr.mxu0 0.0
    %1669 = vmatpush1.msra.mxu0 0.0
    %1670 = vmatprep.subr.mxu0 0.0
    %1671 = vmatpush1.msra.mxu0 0.0
    %1672 = vmatprep.subr.mxu0 0.0
    %1673 = vmatpush1.msra.mxu0 0.0
    %1674 = vmatprep.subr.mxu0 0.0
    %1675 = vmatpush1.msra.mxu0 0.0
    %1676 = vmatprep.subr.mxu0 0.0
    %1677 = vmatpush1.msra.mxu0 0.0
    %1678 = vmatprep.subr.mxu0 0.0
    %1679 = vmatpush1.msra.mxu0 0.0
    %1680 = vmatprep.subr.mxu0 0.0
    %1681 = vmatpush1.msra.mxu0 0.0
    %1682 = vmatprep.subr.mxu0 0.0
    %1683 = vmatpush1.msra.mxu0 0.0
    %1684 = vmatprep.subr.mxu0 0.0
    %1685 = vmatpush1.msra.mxu0 0.0
    %1686 = vmatprep.subr.mxu0 0.0
    %1687 = vmatpush1.msra.mxu0 0.0
    %1688 = vmatprep.subr.mxu0 0.0
    %1689 = vmatpush1.msra.mxu0 0.0
    %1690 = vmatprep.mubr.f32.mxu0 0.0
    %1691 = vmatmul.mubr.f32.gmra.mrb[0].mxu0 %v1411
    %v1692 = vpop.f32.mrb[0].mxu0
    %v1693 = vadd.f32 %v1409, %v1692
    %v1694 = vpop.f32.mrb[0].mxu0
    %v1695 = vadd.f32 %v1409, %v1694
    %1696 = vdwg.mxu0
    %v1705 = vcombine.low %v1480, %v1482
    %v1706 = vcombine.low %v1551, %v1553
    %v1707 = vcombine.low %v1622, %v1624
    %v1708 = vcombine.low %v1693, %v1695
    %v1710 = vunpack.c.l.s4 1966171168
    %v1711 = vunpack.c.0.s8 %v1710
    %v1712 = vlaneseq
    %v1713 = vshrl.u32 %v1712, 7
    %v1714 = vsub.s32 %v1711, %v1713
    %v1715 = vrot.slane %v1705, %v1714
    %v1717 = vunpack.c.l.s4 1966171168
    %v1718 = vunpack.c.0.s8 %v1717
    %v1719 = vlaneseq
    %v1720 = vshrl.u32 %v1719, 7
    %v1721 = vsub.s32 %v1718, %v1720
    %v1722 = vrot.slane %v1706, %v1721
    %v1724 = vunpack.c.l.s4 1966171168
    %v1725 = vunpack.c.0.s8 %v1724
    %v1726 = vlaneseq
    %v1727 = vshrl.u32 %v1726, 7
    %v1728 = vsub.s32 %v1725, %v1727
    %v1729 = vrot.slane %v1707, %v1728
    %v1731 = vunpack.c.l.s4 1966171168
    %v1732 = vunpack.c.0.s8 %v1731
    %v1733 = vlaneseq
    %v1734 = vshrl.u32 %v1733, 7
    %v1735 = vsub.s32 %v1732, %v1734
    %v1736 = vrot.slane %v1708, %v1735
    %v1737 = vcombine.low %v1715, %v1722
    %v1738 = vcombine.low %v1729, %v1736
    %v1740 = vunpack.c.l.s4 1966171168
    %v1741 = vunpack.c.0.s8 %v1740
    %v1742 = vlaneseq
    %v1743 = vshrl.u32 %v1742, 7
    %v1744 = vsub.s32 %v1741, %v1743
    %v1745 = vrot.slane %v1737, %v1744
    %v1747 = vunpack.c.l.s4 1966171168
    %v1748 = vunpack.c.0.s8 %v1747
    %v1749 = vlaneseq
    %v1750 = vshrl.u32 %v1749, 7
    %v1751 = vsub.s32 %v1748, %v1750
    %v1752 = vrot.slane %v1738, %v1751
    %v1753 = vcombine.low %v1745, %v1752
    %1755 = vst [vmem:[#allocation3] sm:$0xff] %v1753
    // Predicated region
    $region30: #{tpu_custom_call.1} parent=1 // pred_check
      _
    $region31: #{tpu_custom_call.1} parent=1 // pred_check_branch
      %1757 = sbr.rel (0) target = $region33
    $region32: #{tpu_custom_call.1} parent=1 // pred_region
      %s1759 = ssub.s32 128, 128
      %1760 = vsyncadd [#allocation4], %s1759
      %s1762 = sshll.u32 [#allocation3], 4
      %s1763 = int_to_ptr.vmem [resolvable:$true] %s1762
      %1765 = dma.vmem_to_hbm [thread:$0]  %s1763, 128, %s7, [#allocation4]
    $region33: #{tpu_custom_call.1} parent=1 // pred_fallthru
      _
    // Predicated region
    $region34: #{tpu_custom_call.1} parent=1 // pred_check
      _
    $region35: #{tpu_custom_call.1} parent=1 // pred_check_branch
      %1767 = sbr.rel (0) target = $region37
    $region36: #{tpu_custom_call.1} parent=1 // pred_region
      %1768 = dma.done [#allocation4], 128
    $region37: #{tpu_custom_call.1} parent=1 // pred_fallthru
      _
    %1769 = vsyncpa [#allocation4], 1

</llo_original>
